<compile_context>
chip_gen: v6e
topology: v6e:2x2x1
jax: 0.10.0
libtpu: 0.0.40
codegen_flags: <defaults>
</compile_context>

<pallas_src>
import functools
import math

import jax
import jax.numpy as jnp
from jax.experimental import pallas as pl
from jax.experimental.pallas import tpu as pltpu


# ----------------------------------------------------------------------------
# Heads-batched flash attention (online softmax), output in concat layout
# ----------------------------------------------------------------------------
def _flash_mha_kernel(q_ref, k_ref, v_ref, o_ref, m_sc, l_sc, acc_sc, *,
                      scale, num_head, d_k):
    """One (batch, q-tile) block over all heads; grid axis 2 iterates kv tiles.

    q_ref: (H, tq, dk)   k_ref/v_ref: (H, tk, dk)   o_ref: (tq, H*dk)
    m_sc/l_sc: (H, tq, 1) f32   acc_sc: (H, tq, dk) f32
    """
    kv_idx = pl.program_id(2)

    @pl.when(kv_idx == 0)
    def _init():
        m_sc[...] = jnp.full_like(m_sc, -jnp.inf)
        l_sc[...] = jnp.zeros_like(l_sc)
        acc_sc[...] = jnp.zeros_like(acc_sc)

    # Fold 1/sqrt(dk) into the small (H, tq, dk) operand instead of the
    # (H, tq, tk) score tile.
    q = q_ref[...] * scale
    # scores (H, tq, tk) on the MXU, batched over heads.
    s = jnp.einsum('hqd,hkd->hqk', q, k_ref[...],
                   preferred_element_type=jnp.float32)
    # TODO(synk): optional boolean `mask` (masked_fill_(mask, -1e9)) not implemented.

    m_prev = m_sc[...]
    m_new = jnp.maximum(m_prev, s.max(axis=-1, keepdims=True))
    alpha = jnp.exp(m_prev - m_new)
    p = jnp.exp(s - m_new)

    l_sc[...] = alpha * l_sc[...] + p.sum(axis=-1, keepdims=True)
    acc_sc[...] = alpha * acc_sc[...] + jnp.einsum(
        'hqk,hkd->hqd', p.astype(v_ref.dtype), v_ref[...],
        preferred_element_type=jnp.float32)
    m_sc[...] = m_new

    @pl.when(kv_idx == pl.num_programs(2) - 1)
    def _finalize():
        inv_l = pl.reciprocal(l_sc[...], approx=True)      # EUP, ~free
        ctx = acc_sc[...] * inv_l                          # (H, tq, dk) f32
        # Assemble the heads into concat layout inside VMEM -> lane-dense store.
        out = jnp.concatenate([ctx[h] for h in range(num_head)], axis=-1)
        o_ref[...] = out.astype(o_ref.dtype)


def _flash_mha(q, k, v, *, tq, tk):
    """q/k/v: (B, H, L, dk) -> context in concat layout (B, L, H*dk)."""
    B, H, Lq, dk = q.shape
    _, _, Lk, _ = k.shape
    D = H * dk
    assert Lq % tq == 0 and Lk % tk == 0 and tq % 8 == 0 and tk % 8 == 0
    scale = 1.0 / math.sqrt(dk)

    return pl.pallas_call(
        functools.partial(_flash_mha_kernel, scale=scale, num_head=H, d_k=dk),
        out_shape=jax.ShapeDtypeStruct((B, Lq, D), q.dtype),
        grid_spec=pltpu.PrefetchScalarGridSpec(
            num_scalar_prefetch=0,
            grid=(B, Lq // tq, Lk // tk),
            in_specs=[
                pl.BlockSpec((None, H, tq, dk), lambda b, qi, ki: (b, 0, qi, 0)),
                pl.BlockSpec((None, H, tk, dk), lambda b, qi, ki: (b, 0, ki, 0)),
                pl.BlockSpec((None, H, tk, dk), lambda b, qi, ki: (b, 0, ki, 0)),
            ],
            out_specs=pl.BlockSpec((None, tq, D), lambda b, qi, ki: (b, qi, 0)),
            scratch_shapes=[
                pltpu.VMEM((H, tq, 1), jnp.float32),   # running max  m_i
                pltpu.VMEM((H, tq, 1), jnp.float32),   # running sum  l_i
                pltpu.VMEM((H, tq, dk), jnp.float32),  # output accumulator
            ]),
        compiler_params=pltpu.CompilerParams(
            dimension_semantics=("parallel", "parallel", "arbitrary")),
    )(q, k, v)


# ----------------------------------------------------------------------------
# Output projection y = x @ W^T (nn.Linear, bias=False) — W kept in (out, in)
# layout; the contraction over W's 'in' dim happens inside the kernel, so no
# transposed copy of W is materialized in HBM.
# ----------------------------------------------------------------------------
def _proj_kernel(x_ref, w_ref, o_ref, acc_ref):
    @pl.when(pl.program_id(2) == 0)
    def _init():
        acc_ref[...] = jnp.zeros_like(acc_ref)

    # x (tm, tk) contracted with W chunk (tn, tk) over the last dim -> (tm, tn)
    acc_ref[...] += jax.lax.dot_general(
        x_ref[...], w_ref[...],
        dimension_numbers=(((1,), (1,)), ((), ())),
        preferred_element_type=jnp.float32)

    @pl.when(pl.program_id(2) == pl.num_programs(2) - 1)
    def _store():
        o_ref[...] = acc_ref[...].astype(o_ref.dtype)


def _linear_no_bias(x, w, *, tm=256, tn=256, tk=512):
    """x: (M, K), w: (N, K)  ->  x @ w.T : (M, N)."""
    M, K = x.shape
    N, K2 = w.shape
    assert K == K2
    tm, tn, tk = min(tm, M), min(tn, N), min(tk, K)
    assert M % tm == 0 and N % tn == 0 and K % tk == 0 and tm % 8 == 0

    return pl.pallas_call(
        _proj_kernel,
        out_shape=jax.ShapeDtypeStruct((M, N), x.dtype),
        grid_spec=pltpu.PrefetchScalarGridSpec(
            num_scalar_prefetch=0,
            grid=(M // tm, N // tn, K // tk),
            in_specs=[pl.BlockSpec((tm, tk), lambda i, j, k: (i, k)),
                      pl.BlockSpec((tn, tk), lambda i, j, k: (j, k))],
            out_specs=pl.BlockSpec((tm, tn), lambda i, j, k: (i, j)),
            scratch_shapes=[pltpu.VMEM((tm, tn), jnp.float32)]),
        compiler_params=pltpu.CompilerParams(
            dimension_semantics=("parallel", "parallel", "arbitrary")),
    )(x, w)


# ----------------------------------------------------------------------------
# MultiHeadAttention forward
# ----------------------------------------------------------------------------
def multi_head_attention(query, key, value, w_concat, *, num_head, mask=None,
                         tq=512, tk=256):
    if mask is not None:
        # TODO(synk): mask path (attn_score.masked_fill_(mask, -1e9)) not implemented.
        raise NotImplementedError("mask is not supported in this kernel")

    B, L, D = query.shape
    assert D % num_head == 0
    dk = D // num_head
    tq, tk = min(tq, L), min(tk, L)

    # NOTE: w_q / w_k / w_v projections are dead code in the original PyTorch
    # forward (their outputs are overwritten by split(query/key/value)); they
    # are faithfully not applied here.
    def split_heads(x):  # (B, L, D) -> (B, H, L, dk)
        return jnp.transpose(x.reshape(B, L, num_head, dk), (0, 2, 1, 3))

    # Attention kernel writes its output directly in concat layout (B, L, D);
    # no separate concat transpose / HBM round trip.
    ctx = _flash_mha(split_heads(query), split_heads(key), split_heads(value),
                     tq=tq, tk=tk)

    # w_concat is an nn.Linear(d_model, d_model, bias=False) weight (out, in).
    out = _linear_no_bias(ctx.reshape(B * L, D), w_concat)
    return out.reshape(B, L, D)


if __name__ == "__main__":
    # Small shapes consistent with the module (d_model divisible by num_head).
    num_head = 4
    d_model = 256
    batch, seq_len = 2, 32
    d_k = d_model // num_head

    root = jax.random.PRNGKey(0)
    kq, kk, kv, kw = jax.random.split(root, 4)
    query = jax.random.normal(kq, (batch, seq_len, d_model), jnp.float32)
    key_ = jax.random.normal(kk, (batch, seq_len, d_model), jnp.float32)
    value = jax.random.normal(kv, (batch, seq_len, d_model), jnp.float32)
    # nn.Linear(d_model, d_model, bias=False) default init ~ U(-1/sqrt(in), 1/sqrt(in))
    bound = 1.0 / math.sqrt(d_model)
    w_concat = jax.random.uniform(kw, (d_model, d_model), jnp.float32, -bound, bound)

    out = multi_head_attention(query, key_, value, w_concat, num_head=num_head)
    out = jax.block_until_ready(out)

    # Pure-JAX reference reproducing the PyTorch forward exactly.
    def split(x):
        return jnp.transpose(x.reshape(batch, seq_len, num_head, d_k), (0, 2, 1, 3))

    q_h, k_h, v_h = split(query), split(key_), split(value)
    scores = jnp.einsum("bhqd,bhkd->bhqk", q_h, k_h) / math.sqrt(d_k)
    probs = jax.nn.softmax(scores, axis=-1)
    ctx_ref = jnp.einsum("bhqk,bhkd->bhqd", probs, v_h)
    ctx_ref = jnp.transpose(ctx_ref, (0, 2, 1, 3)).reshape(batch, seq_len, d_model)
    ref = ctx_ref @ w_concat.T

    assert out.shape == (batch, seq_len, d_model)
    max_diff = float(jnp.max(jnp.abs(out - ref)))
    # Tolerance accounts for reduced-precision f32 MXU passes + approx reciprocal.
    assert jnp.allclose(out, ref, atol=2e-2, rtol=2e-2), f"max diff {max_diff}"

    print("KERNEL_OK")
</pallas_src>

<mosaic_0001>
module attributes {stable_mosaic.version = 11 : i64} {
  func.func @_flash_mha_kernel(%arg0: i32, %arg1: i32, %arg2: i32, %arg3: memref<1x4x32x64xf32, #tpu.memory_space<vmem>>, %arg4: memref<1x4x32x64xf32, #tpu.memory_space<vmem>>, %arg5: memref<1x4x32x64xf32, #tpu.memory_space<vmem>>, %arg6: memref<1x32x256xf32, #tpu.memory_space<vmem>>, %arg7: memref<4x32x1xf32, #tpu.memory_space<vmem>>, %arg8: memref<4x32x1xf32, #tpu.memory_space<vmem>>, %arg9: memref<4x32x64xf32, #tpu.memory_space<vmem>>) attributes {dimension_semantics = [#tpu.dimension_semantics<parallel>, #tpu.dimension_semantics<parallel>, #tpu.dimension_semantics<arbitrary>], iteration_bounds = array<i64: 2, 1, 1>, scalar_prefetch = 0 : i64, scratch_operands = 3 : i64, tpu.core_type = #tpu.core_type<tc>, window_params = [{transform_indices = @transform_0, window_bounds = array<i64: 1, 4, 32, 64>}, {transform_indices = @transform_1, window_bounds = array<i64: 1, 4, 32, 64>}, {transform_indices = @transform_2, window_bounds = array<i64: 1, 4, 32, 64>}, {transform_indices = @transform_3, window_bounds = array<i64: 1, 32, 256>}]} {
    %c0_i32 = arith.constant 0 : i32
    %0 = arith.cmpi eq, %arg2, %c0_i32 : i32
    %1 = arith.extui %0 : i1 to i32
    %c0_i32_0 = arith.constant 0 : i32
    %2 = arith.cmpi ne, %1, %c0_i32_0 : i32
    scf.if %2 {
      %cst_36 = arith.constant 0xFF800000 : f32
      %37 = vector.broadcast %cst_36 : f32 to vector<4x32x1xf32>
      %c0_37 = arith.constant 0 : index
      %c0_38 = arith.constant 0 : index
      %c0_39 = arith.constant 0 : index
      %38 = vector.load %arg7[%c0_37, %c0_38, %c0_39] : memref<4x32x1xf32, #tpu.memory_space<vmem>>, vector<4x32x1xf32>
      tpu.vector_store %arg7[%c0_37, %c0_38, %c0_39], %37 {strides = array<i32>} : memref<4x32x1xf32, #tpu.memory_space<vmem>>, vector<4x32x1xf32>,
      %cst_40 = arith.constant 0.000000e+00 : f32
      %39 = vector.broadcast %cst_40 : f32 to vector<4x32x1xf32>
      %c0_41 = arith.constant 0 : index
      %c0_42 = arith.constant 0 : index
      %c0_43 = arith.constant 0 : index
      %40 = vector.load %arg8[%c0_41, %c0_42, %c0_43] : memref<4x32x1xf32, #tpu.memory_space<vmem>>, vector<4x32x1xf32>
      tpu.vector_store %arg8[%c0_41, %c0_42, %c0_43], %39 {strides = array<i32>} : memref<4x32x1xf32, #tpu.memory_space<vmem>>, vector<4x32x1xf32>,
      %cst_44 = arith.constant 0.000000e+00 : f32
      %41 = vector.broadcast %cst_44 : f32 to vector<4x32x64xf32>
      %c0_45 = arith.constant 0 : index
      %c0_46 = arith.constant 0 : index
      %c0_47 = arith.constant 0 : index
      %42 = vector.load %arg9[%c0_45, %c0_46, %c0_47] : memref<4x32x64xf32, #tpu.memory_space<vmem>>, vector<4x32x64xf32>
      tpu.vector_store %arg9[%c0_45, %c0_46, %c0_47], %41 {strides = array<i32>} : memref<4x32x64xf32, #tpu.memory_space<vmem>>, vector<4x32x64xf32>,
    } else {
    }
    %c0 = arith.constant 0 : index
    %c0_1 = arith.constant 0 : index
    %c0_2 = arith.constant 0 : index
    %c0_3 = arith.constant 0 : index
    %3 = vector.load %arg3[%c0, %c0_1, %c0_2, %c0_3] : memref<1x4x32x64xf32, #tpu.memory_space<vmem>>, vector<1x4x32x64xf32>
    %4 = vector.shape_cast %3 : vector<1x4x32x64xf32> to vector<4x32x64xf32>
    %cst = arith.constant 1.250000e-01 : f32
    %5 = vector.broadcast %cst : f32 to vector<4x32x64xf32>
    %6 = arith.mulf %4, %5 : vector<4x32x64xf32>
    %c0_4 = arith.constant 0 : index
    %c0_5 = arith.constant 0 : index
    %c0_6 = arith.constant 0 : index
    %c0_7 = arith.constant 0 : index
    %7 = vector.load %arg4[%c0_4, %c0_5, %c0_6, %c0_7] : memref<1x4x32x64xf32, #tpu.memory_space<vmem>>, vector<1x4x32x64xf32>
    %8 = vector.shape_cast %7 : vector<1x4x32x64xf32> to vector<4x32x64xf32>
    "tpu.trace_start"() <{level = 10 : i32, message = "hqd,hkd->hqk"}> : () -> ()
    %cst_8 = arith.constant dense<0.000000e+00> : vector<4x32x32xf32>
    %9 = tpu.matmul %6, %8, %cst_8 {dimension_numbers = #tpu.dot_dimension_numbers<[2], [2], [1], [1], [0, 0, 0, 1, 1, 1], [0], [0]>} : vector<4x32x64xf32>, vector<4x32x64xf32>, vector<4x32x32xf32> -> vector<4x32x32xf32>
    "tpu.trace_stop"() : () -> ()
    %c0_9 = arith.constant 0 : index
    %c0_10 = arith.constant 0 : index
    %c0_11 = arith.constant 0 : index
    %10 = vector.load %arg7[%c0_9, %c0_10, %c0_11] : memref<4x32x1xf32, #tpu.memory_space<vmem>>, vector<4x32x1xf32>
    %cst_12 = arith.constant dense<0xFF800000> : vector<4x32xf32>
    %11 = vector.multi_reduction <maximumf>, %9, %cst_12 [2] : vector<4x32x32xf32> to vector<4x32xf32>
    %12 = vector.shape_cast %11 : vector<4x32xf32> to vector<4x32x1xf32>
    %13 = arith.maximumf %10, %12 : vector<4x32x1xf32>
    %14 = arith.subf %10, %13 : vector<4x32x1xf32>
    %15 = math.exp %14 : vector<4x32x1xf32>
    %16 = vector.broadcast %13 : vector<4x32x1xf32> to vector<4x32x32xf32>
    %17 = arith.subf %9, %16 : vector<4x32x32xf32>
    %18 = math.exp %17 : vector<4x32x32xf32>
    %c0_13 = arith.constant 0 : index
    %c0_14 = arith.constant 0 : index
    %c0_15 = arith.constant 0 : index
    %19 = vector.load %arg8[%c0_13, %c0_14, %c0_15] : memref<4x32x1xf32, #tpu.memory_space<vmem>>, vector<4x32x1xf32>
    %20 = arith.mulf %15, %19 : vector<4x32x1xf32>
    %cst_16 = arith.constant dense<0.000000e+00> : vector<4x32xf32>
    %21 = vector.multi_reduction <add>, %18, %cst_16 [2] : vector<4x32x32xf32> to vector<4x32xf32>
    %22 = vector.shape_cast %21 : vector<4x32xf32> to vector<4x32x1xf32>
    %23 = arith.addf %20, %22 : vector<4x32x1xf32>
    %c0_17 = arith.constant 0 : index
    %c0_18 = arith.constant 0 : index
    %c0_19 = arith.constant 0 : index
    %24 = vector.load %arg8[%c0_17, %c0_18, %c0_19] : memref<4x32x1xf32, #tpu.memory_space<vmem>>, vector<4x32x1xf32>
    tpu.vector_store %arg8[%c0_17, %c0_18, %c0_19], %23 {strides = array<i32>} : memref<4x32x1xf32, #tpu.memory_space<vmem>>, vector<4x32x1xf32>,
    %c0_20 = arith.constant 0 : index
    %c0_21 = arith.constant 0 : index
    %c0_22 = arith.constant 0 : index
    %25 = vector.load %arg9[%c0_20, %c0_21, %c0_22] : memref<4x32x64xf32, #tpu.memory_space<vmem>>, vector<4x32x64xf32>
    %26 = vector.broadcast %15 : vector<4x32x1xf32> to vector<4x32x64xf32>
    %27 = arith.mulf %26, %25 : vector<4x32x64xf32>
    %c0_23 = arith.constant 0 : index
    %c0_24 = arith.constant 0 : index
    %c0_25 = arith.constant 0 : index
    %c0_26 = arith.constant 0 : index
    %28 = vector.load %arg5[%c0_23, %c0_24, %c0_25, %c0_26] : memref<1x4x32x64xf32, #tpu.memory_space<vmem>>, vector<1x4x32x64xf32>
    %29 = vector.shape_cast %28 : vector<1x4x32x64xf32> to vector<4x32x64xf32>
    "tpu.trace_start"() <{level = 10 : i32, message = "hqk,hkd->hqd"}> : () -> ()
    %cst_27 = arith.constant dense<0.000000e+00> : vector<4x32x64xf32>
    %30 = tpu.matmul %18, %29, %cst_27 {dimension_numbers = #tpu.dot_dimension_numbers<[2], [1], [1], [2], [0, 0, 0, 1, 1, 2], [0], [0]>} : vector<4x32x32xf32>, vector<4x32x64xf32>, vector<4x32x64xf32> -> vector<4x32x64xf32>
    "tpu.trace_stop"() : () -> ()
    %31 = arith.addf %27, %30 : vector<4x32x64xf32>
    %c0_28 = arith.constant 0 : index
    %c0_29 = arith.constant 0 : index
    %c0_30 = arith.constant 0 : index
    %32 = vector.load %arg9[%c0_28, %c0_29, %c0_30] : memref<4x32x64xf32, #tpu.memory_space<vmem>>, vector<4x32x64xf32>
    tpu.vector_store %arg9[%c0_28, %c0_29, %c0_30], %31 {strides = array<i32>} : memref<4x32x64xf32, #tpu.memory_space<vmem>>, vector<4x32x64xf32>,
    %c0_31 = arith.constant 0 : index
    %c0_32 = arith.constant 0 : index
    %c0_33 = arith.constant 0 : index
    %33 = vector.load %arg7[%c0_31, %c0_32, %c0_33] : memref<4x32x1xf32, #tpu.memory_space<vmem>>, vector<4x32x1xf32>
    tpu.vector_store %arg7[%c0_31, %c0_32, %c0_33], %13 {strides = array<i32>} : memref<4x32x1xf32, #tpu.memory_space<vmem>>, vector<4x32x1xf32>,
    %c0_i32_34 = arith.constant 0 : i32
    %34 = arith.cmpi eq, %arg2, %c0_i32_34 : i32
    %35 = arith.extui %34 : i1 to i32
    %c0_i32_35 = arith.constant 0 : i32
    %36 = arith.cmpi ne, %35, %c0_i32_35 : i32
    scf.if %36 {
      %c0_36 = arith.constant 0 : index
      %c0_37 = arith.constant 0 : index
      %c0_38 = arith.constant 0 : index
      %37 = vector.load %arg8[%c0_36, %c0_37, %c0_38] : memref<4x32x1xf32, #tpu.memory_space<vmem>>, vector<4x32x1xf32>
      %38 = tpu.reciprocal %37 {approx = true} : vector<4x32x1xf32> -> vector<4x32x1xf32>
      %c0_39 = arith.constant 0 : index
      %c0_40 = arith.constant 0 : index
      %c0_41 = arith.constant 0 : index
      %39 = vector.load %arg9[%c0_39, %c0_40, %c0_41] : memref<4x32x64xf32, #tpu.memory_space<vmem>>, vector<4x32x64xf32>
      %40 = vector.broadcast %38 : vector<4x32x1xf32> to vector<4x32x64xf32>
      %41 = arith.mulf %39, %40 : vector<4x32x64xf32>
      %42 = vector.extract_strided_slice %41 {offsets = [0, 0, 0], sizes = [1, 32, 64], strides = [1, 1, 1]} : vector<4x32x64xf32> to vector<1x32x64xf32>
      %43 = vector.shape_cast %42 : vector<1x32x64xf32> to vector<32x64xf32>
      %44 = vector.extract_strided_slice %41 {offsets = [1, 0, 0], sizes = [1, 32, 64], strides = [1, 1, 1]} : vector<4x32x64xf32> to vector<1x32x64xf32>
      %45 = vector.shape_cast %44 : vector<1x32x64xf32> to vector<32x64xf32>
      %46 = vector.extract_strided_slice %41 {offsets = [2, 0, 0], sizes = [1, 32, 64], strides = [1, 1, 1]} : vector<4x32x64xf32> to vector<1x32x64xf32>
      %47 = vector.shape_cast %46 : vector<1x32x64xf32> to vector<32x64xf32>
      %48 = vector.extract_strided_slice %41 {offsets = [3, 0, 0], sizes = [1, 32, 64], strides = [1, 1, 1]} : vector<4x32x64xf32> to vector<1x32x64xf32>
      %49 = vector.shape_cast %48 : vector<1x32x64xf32> to vector<32x64xf32>
      %50 = tpu.concatenate %43, %45, %47, %49 in 1 : vector<32x64xf32>, vector<32x64xf32>, vector<32x64xf32>, vector<32x64xf32> -> vector<32x256xf32>
      %c0_42 = arith.constant 0 : index
      %c0_43 = arith.constant 0 : index
      %c0_44 = arith.constant 0 : index
      %51 = vector.load %arg6[%c0_42, %c0_43, %c0_44] : memref<1x32x256xf32, #tpu.memory_space<vmem>>, vector<1x32x256xf32>
      %52 = vector.shape_cast %51 : vector<1x32x256xf32> to vector<32x256xf32>
      %53 = vector.shape_cast %50 : vector<32x256xf32> to vector<1x32x256xf32>
      tpu.vector_store %arg6[%c0_42, %c0_43, %c0_44], %53 {strides = array<i32>} : memref<1x32x256xf32, #tpu.memory_space<vmem>>, vector<1x32x256xf32>,
    } else {
    }
    return
  }
  func.func @transform_0(%arg0: i32, %arg1: i32, %arg2: i32) -> (i32, i32, i32, i32) {
    %c0_i32 = arith.constant 0 : i32
    %c0_i32_0 = arith.constant 0 : i32
    %c0_i32_1 = arith.constant 0 : i32
    return %arg0, %c0_i32, %arg1, %c0_i32_0 : i32, i32, i32, i32
  }
  func.func @transform_1(%arg0: i32, %arg1: i32, %arg2: i32) -> (i32, i32, i32, i32) {
    %c0_i32 = arith.constant 0 : i32
    %c0_i32_0 = arith.constant 0 : i32
    %c0_i32_1 = arith.constant 0 : i32
    return %arg0, %c0_i32, %arg2, %c0_i32_0 : i32, i32, i32, i32
  }
  func.func @transform_2(%arg0: i32, %arg1: i32, %arg2: i32) -> (i32, i32, i32, i32) {
    %c0_i32 = arith.constant 0 : i32
    %c0_i32_0 = arith.constant 0 : i32
    %c0_i32_1 = arith.constant 0 : i32
    return %arg0, %c0_i32, %arg2, %c0_i32_0 : i32, i32, i32, i32
  }
  func.func @transform_3(%arg0: i32, %arg1: i32, %arg2: i32) -> (i32, i32, i32) {
    %c0_i32 = arith.constant 0 : i32
    %c0_i32_0 = arith.constant 0 : i32
    return %arg0, %arg1, %c0_i32 : i32, i32, i32
  }
}

</mosaic_0001>

<llo_original>
// kernel: tpu_custom_call.1
$region0: #{tpu_custom_call.1}
  #allocation0 [shape = 'u32[]', space=smem, size = 0x4, offset = 0x4, fixed_abs, tag = 'smem constant byte address 0x4 - core index']
  #allocation1 [shape = 'u32[144,128]{1,0:T(1,128)}', space=vmem, size = 0x12000, scoped, tag = 'internal scratch']
  #allocation2 [shape = 'f32[4,32,1]{2,1,0:T(8,128)}', space=vmem, size = 0x10000, scoped, tag = 'scratch operand']
  #allocation3 [shape = 'f32[4,32,1]{2,1,0:T(8,128)}', space=vmem, size = 0x10000, scoped, tag = 'scratch operand']
  #allocation4 [shape = 'f32[4,32,64]{2,1,0:T(8,128)}', space=vmem, size = 0x10000, scoped, tag = 'scratch operand']
  %s0 = inlined_call_operand.hbm [shape: f32[2,4,32,64], index: 0, kind: input, shape index: {}]
  %s1 = inlined_call_operand.hbm [shape: f32[2,4,32,64], index: 1, kind: input, shape index: {}]
  %s2 = inlined_call_operand.hbm [shape: f32[2,4,32,64], index: 2, kind: input, shape index: {}]
  %s3 = inlined_call_operand.hbm [shape: f32[2,32,256], index: 3, kind: output, shape index: {}]
  %s4 = sld [smem:[#allocation0]]
  $region65: #{tpu_custom_call.1} parent=0
    _
  %s6 = ssub.s32 1, %s4
  %s7 = scalar_select 0, %s6, %s4
  $region1: #{tpu_custom_call.1} parent=0
    #allocation5 [shape = 'u8[131072]{0}', space=vmem, size = 0x20000, scoped, tag = 'input window, operand 0']
    #allocation6 [shape = 's32[2]{0}', space=sflag, size = 0x8, scoped, tag = 'scoped memory for tpu_custom_call.1']
    #allocation7 [shape = 's32[2]{0}', space=sflag, size = 0x8, scoped, tag = 'scoped memory for tpu_custom_call.1']
    #allocation8 [shape = 'u8[131072]{0}', space=vmem, size = 0x20000, scoped, tag = 'input window, operand 1']
    #allocation9 [shape = 's32[2]{0}', space=sflag, size = 0x8, scoped, tag = 'scoped memory for tpu_custom_call.1']
    #allocation10 [shape = 'u8[131072]{0}', space=vmem, size = 0x20000, scoped, tag = 'input window, operand 2']
    #allocation11 [shape = 'u8[65536]{0}', space=vmem, size = 0x10000, scoped, tag = 'output window, operand 0']
    %8 = vsyncpa [#allocation6], 0
    %s9 = scalar_lea.sflag [#allocation6], 1
    %10 = vsyncpa %s9, 0
    %11 = vsyncpa [#allocation9], 0
    %s12 = scalar_lea.sflag [#allocation9], 1
    %13 = vsyncpa %s12, 0
    %14 = vsyncpa [#allocation7], 0
    %s15 = scalar_lea.sflag [#allocation7], 1
    %16 = vsyncpa %s15, 0
    loop: start=0, step=1, limit=4
    $region2: #{tpu_custom_call.1} parent=1 // loop_pre_header
      _
    $region3: #{tpu_custom_call.1} parent=1 // loop_header
      %s18 = sphi 0, %s22
      %p19 = scmp.ge.s32.totalorder %s18, 4
      %s25 = sphi 0, %s44
      %s26 = sphi 0, %s40
      %s27 = sphi 0, %s36
      %s28 = sphi 0, %s25
      %s29 = sphi 0, %s26
      %s30 = sphi 0, %s27
      %s31 = sphi 0, %s28
      %s32 = sphi 0, %s29
      %s33 = sphi 0, %s30
      %s49 = sphi 0, %s51
      %s52 = sphi 0, %s49
      %s53 = sphi 0, %s52
      %s69 = sphi 0, %s53
      %s77 = sphi 0, %s79
      %s80 = sphi 0, %s77
      %s81 = sphi 0, %s80
      %s97 = sphi 0, %s81
      %s105 = sphi 0, %s107
      %s108 = sphi 0, %s105
      %s109 = sphi 0, %s108
      %s125 = sphi 0, %s109
      %s133 = sphi 0, %s135
      %s136 = sphi 0, %s133
      %s137 = sphi 0, %s136
      %s153 = sphi 0, %s137
    $region4: #{tpu_custom_call.1} parent=1 // loop_header_branch
      %21 = sbr.rel (%p19) target = $region8
    $region5: #{tpu_custom_call.1} parent=1 // loop_body
      %s23 = ssub.s32 %s18, 1
      %s24 = ssub.s32 %s18, 2
      %s34 = sadd.s32 1, %s27
      %p35 = scmp.ge.s32.totalorder %s34, 1
      %s36 = scalar_select %p35, 0, %s34
      %s37 = sadd.s32 1, %s26
      %s38 = scalar_select %p35, %s37, %s26
      %p39 = scmp.ge.s32.totalorder %s38, 1
      %s40 = scalar_select %p39, 0, %s38
      %s41 = sadd.s32 1, %s25
      %s42 = scalar_select %p39, %s41, %s25
      %p43 = scmp.ge.s32.totalorder %s42, 2
      %s44 = scalar_select %p43, 0, %s42
      %s45 = ssub.s32 %s25, %s44
      %s46 = ssub.s32 %s26, %s40
      %s47 = sor.u32 %s45, %s46
      %p48 = scmp.eq.s32.totalorder %s47, 0
      %s50 = sadd.s32 %s49, 1
      %s51 = scalar_select %p48, %s49, %s50
      %p54 = pneg %p48
      %p55 = scmp.eq.s32.totalorder %s18, 1
      %p56 = por %p54, %p55
      %p57 = scmp.ne.s32.totalorder %s49, %s52
      %p58 = scmp.eq.s32.totalorder %s18, 0
      %p59 = por %p57, %p58
      %p60 = scmp.ne.s32.totalorder %s49, %s52
      %p61 = scmp.eq.s32.totalorder %s23, 1
      %p62 = por %p60, %p61
      %p63 = scmp.ne.s32.totalorder %s52, %s53
      %p64 = scmp.eq.s32.totalorder %s23, 0
      %p65 = por %p63, %p64
      %p66 = scmp.ne.s32.totalorder %s52, %s53
      %p67 = scmp.eq.s32.totalorder %s24, 1
      %p68 = por %p66, %p67
      %p70 = scmp.ne.s32.totalorder %s53, %s69
      %p71 = scmp.eq.s32.totalorder %s24, 0
      %p72 = por %p70, %p71
      %s73 = ssub.s32 %s25, %s44
      %s74 = ssub.s32 %s27, %s36
      %s75 = sor.u32 %s73, %s74
      %p76 = scmp.eq.s32.totalorder %s75, 0
      %s78 = sadd.s32 %s77, 1
      %s79 = scalar_select %p76, %s77, %s78
      %p82 = pneg %p76
      %p83 = scmp.eq.s32.totalorder %s18, 1
      %p84 = por %p82, %p83
      %p85 = scmp.ne.s32.totalorder %s77, %s80
      %p86 = scmp.eq.s32.totalorder %s18, 0
      %p87 = por %p85, %p86
      %p88 = scmp.ne.s32.totalorder %s77, %s80
      %p89 = scmp.eq.s32.totalorder %s23, 1
      %p90 = por %p88, %p89
      %p91 = scmp.ne.s32.totalorder %s80, %s81
      %p92 = scmp.eq.s32.totalorder %s23, 0
      %p93 = por %p91, %p92
      %p94 = scmp.ne.s32.totalorder %s80, %s81
      %p95 = scmp.eq.s32.totalorder %s24, 1
      %p96 = por %p94, %p95
      %p98 = scmp.ne.s32.totalorder %s81, %s97
      %p99 = scmp.eq.s32.totalorder %s24, 0
      %p100 = por %p98, %p99
      %s101 = ssub.s32 %s25, %s44
      %s102 = ssub.s32 %s27, %s36
      %s103 = sor.u32 %s101, %s102
      %p104 = scmp.eq.s32.totalorder %s103, 0
      %s106 = sadd.s32 %s105, 1
      %s107 = scalar_select %p104, %s105, %s106
      %p110 = pneg %p104
      %p111 = scmp.eq.s32.totalorder %s18, 1
      %p112 = por %p110, %p111
      %p113 = scmp.ne.s32.totalorder %s105, %s108
      %p114 = scmp.eq.s32.totalorder %s18, 0
      %p115 = por %p113, %p114
      %p116 = scmp.ne.s32.totalorder %s105, %s108
      %p117 = scmp.eq.s32.totalorder %s23, 1
      %p118 = por %p116, %p117
      %p119 = scmp.ne.s32.totalorder %s108, %s109
      %p120 = scmp.eq.s32.totalorder %s23, 0
      %p121 = por %p119, %p120
      %p122 = scmp.ne.s32.totalorder %s108, %s109
      %p123 = scmp.eq.s32.totalorder %s24, 1
      %p124 = por %p122, %p123
      %p126 = scmp.ne.s32.totalorder %s109, %s125
      %p127 = scmp.eq.s32.totalorder %s24, 0
      %p128 = por %p126, %p127
      %s129 = ssub.s32 %s25, %s44
      %s130 = ssub.s32 %s26, %s40
      %s131 = sor.u32 %s129, %s130
      %p132 = scmp.eq.s32.totalorder %s131, 0
      %s134 = sadd.s32 %s133, 1
      %s135 = scalar_select %p132, %s133, %s134
      %p138 = pneg %p132
      %p139 = scmp.eq.s32.totalorder %s18, 1
      %p140 = por %p138, %p139
      %p141 = scmp.ne.s32.totalorder %s133, %s136
      %p142 = scmp.eq.s32.totalorder %s18, 0
      %p143 = por %p141, %p142
      %p144 = scmp.ne.s32.totalorder %s133, %s136
      %p145 = scmp.eq.s32.totalorder %s23, 1
      %p146 = por %p144, %p145
      %p147 = scmp.ne.s32.totalorder %s136, %s137
      %p148 = scmp.eq.s32.totalorder %s23, 0
      %p149 = por %p147, %p148
      %p150 = scmp.ne.s32.totalorder %s136, %s137
      %p151 = scmp.eq.s32.totalorder %s24, 1
      %p152 = por %p150, %p151
      %p154 = scmp.ne.s32.totalorder %s137, %s153
      %p155 = scmp.eq.s32.totalorder %s24, 0
      %p156 = por %p154, %p155
      %p157 = scmp.le.s32.totalorder 1, %s18
      %p158 = scmp.lt.s32.totalorder %s18, 3
      %p159 = pnand %p157, %p158
      %p160 = pneg %p159
      // Predicated region
      $region9: #{tpu_custom_call.1} parent=5 // pred_check
        _
      $region10: #{tpu_custom_call.1} parent=5 // pred_check_branch
        %162 = sbr.rel (%p159) target = $region12
      $region11: #{tpu_custom_call.1} parent=5 // pred_region
        %s163 = ssub.s32 %s18, 1
      $region12: #{tpu_custom_call.1} parent=5 // pred_fallthru
        _
      %p164 = scmp.lt.s32.totalorder %s18, 2
      // Predicated region
      $region13: #{tpu_custom_call.1} parent=5 // pred_check
        %p165 = pneg %p164
      $region14: #{tpu_custom_call.1} parent=5 // pred_check_branch
        %167 = sbr.rel (%p165) target = $region16
      $region15: #{tpu_custom_call.1} parent=5 // pred_region
        // Predicated region
        $region17: #{tpu_custom_call.1} parent=15 // pred_check
          %p168 = pneg %p59
        $region18: #{tpu_custom_call.1} parent=15 // pred_check_branch
          %170 = sbr.rel (%p168) target = $region20
        $region19: #{tpu_custom_call.1} parent=15 // pred_region
          %s171 = sand.u32 %s49, 1
          %s172 = scalar_lea.sflag [#allocation6], %s171
          %s173 = sand.u32 %s49, 1
          %s174 = smul.addr %s173, 128
          %s175 = scalar_lea.vmem [#allocation5], %s174
          %s176 = smul.u32 4, %s26
          %s178 = ssub.s32 2048, 2048
          %179 = vsyncadd %s172, %s178
          %s180 = smul.addr %s25, 16
          %s181 = sadd.s32 %s176, %s180
          %s182 = smul.addr %s181, 128
          %s183 = scalar_lea.hbm %s0, %s182
          %s184 = sshll.u32 %s175, 4
          %s185 = int_to_ptr.vmem [resolvable:$true] %s184
          %190 = dma.hbm_to_vmem [thread:$0]  %s183, 2048, %s185, %s172, 128, 128, 8
        $region20: #{tpu_custom_call.1} parent=15 // pred_fallthru
          _
        // Predicated region
        $region21: #{tpu_custom_call.1} parent=15 // pred_check
          %p191 = pneg %p87
        $region22: #{tpu_custom_call.1} parent=15 // pred_check_branch
          %193 = sbr.rel (%p191) target = $region24
        $region23: #{tpu_custom_call.1} parent=15 // pred_region
          %s194 = sand.u32 %s18, 1
          %s195 = scalar_lea.sflag [#allocation9], %s194
          %s196 = sand.u32 %s77, 1
          %s197 = smul.addr %s196, 128
          %s198 = scalar_lea.vmem [#allocation8], %s197
          %s199 = smul.u32 4, %s27
          %s201 = ssub.s32 2048, 2048
          %202 = vsyncadd %s195, %s201
          %s203 = smul.addr %s25, 16
          %s204 = sadd.s32 %s199, %s203
          %s205 = smul.addr %s204, 128
          %s206 = scalar_lea.hbm %s1, %s205
          %s207 = sshll.u32 %s198, 4
          %s208 = int_to_ptr.vmem [resolvable:$true] %s207
          %213 = dma.hbm_to_vmem [thread:$0]  %s206, 2048, %s208, %s195, 128, 128, 8
        $region24: #{tpu_custom_call.1} parent=15 // pred_fallthru
          _
        // Predicated region
        $region25: #{tpu_custom_call.1} parent=15 // pred_check
          %p214 = pneg %p115
        $region26: #{tpu_custom_call.1} parent=15 // pred_check_branch
          %216 = sbr.rel (%p214) target = $region28
        $region27: #{tpu_custom_call.1} parent=15 // pred_region
          %s217 = sand.u32 %s18, 1
          %s218 = scalar_lea.sflag [#allocation9], %s217
          %s219 = sand.u32 %s105, 1
          %s220 = smul.addr %s219, 128
          %s221 = scalar_lea.vmem [#allocation10], %s220
          %s222 = smul.u32 4, %s27
          %s224 = ssub.s32 2048, 2048
          %225 = vsyncadd %s218, %s224
          %s226 = smul.addr %s25, 16
          %s227 = sadd.s32 %s222, %s226
          %s228 = smul.addr %s227, 128
          %s229 = scalar_lea.hbm %s2, %s228
          %s230 = sshll.u32 %s221, 4
          %s231 = int_to_ptr.vmem [resolvable:$true] %s230
          %236 = dma.hbm_to_vmem [thread:$0]  %s229, 2048, %s231, %s218, 128, 128, 8
        $region28: #{tpu_custom_call.1} parent=15 // pred_fallthru
          _
      $region16: #{tpu_custom_call.1} parent=5 // pred_fallthru
        _
      %p237 = scmp.le.s32.totalorder 1, %s18
      %p238 = scmp.lt.s32.totalorder %s18, 3
      %p239 = pnand %p237, %p238
      %p240 = pneg %p239
      // Predicated region
      $region29: #{tpu_custom_call.1} parent=5 // pred_check
        _
      $region30: #{tpu_custom_call.1} parent=5 // pred_check_branch
        %242 = sbr.rel (%p239) target = $region32
      $region31: #{tpu_custom_call.1} parent=5 // pred_region
        %s243 = ssub.s32 %s18, 1
        %s244 = sand.u32 %s52, 1
        %s245 = scalar_lea.sflag [#allocation6], %s244
        %s246 = sand.u32 %s52, 1
        %s247 = smul.addr %s246, 128
        %s248 = scalar_lea.vmem [#allocation5], %s247
        // Predicated region
        $region33: #{tpu_custom_call.1} parent=31 // pred_check
          %p249 = pneg %p65
        $region34: #{tpu_custom_call.1} parent=31 // pred_check_branch
          %251 = sbr.rel (%p249) target = $region36
        $region35: #{tpu_custom_call.1} parent=31 // pred_region
          %252 = dma.done %s245, 2048
        $region36: #{tpu_custom_call.1} parent=31 // pred_fallthru
          _
        %s253 = sand.u32 %s23, 1
        %s254 = scalar_lea.sflag [#allocation9], %s253
        %s255 = sand.u32 %s80, 1
        %s256 = smul.addr %s255, 128
        %s257 = scalar_lea.vmem [#allocation8], %s256
        // Predicated region
        $region37: #{tpu_custom_call.1} parent=31 // pred_check
          %p258 = pneg %p93
        $region38: #{tpu_custom_call.1} parent=31 // pred_check_branch
          %260 = sbr.rel (%p258) target = $region40
        $region39: #{tpu_custom_call.1} parent=31 // pred_region
          %261 = dma.done %s254, 2048
        $region40: #{tpu_custom_call.1} parent=31 // pred_fallthru
          _
        %s262 = sand.u32 %s23, 1
        %s263 = scalar_lea.sflag [#allocation9], %s262
        %s264 = sand.u32 %s108, 1
        %s265 = smul.addr %s264, 128
        %s266 = scalar_lea.vmem [#allocation10], %s265
        // Predicated region
        $region41: #{tpu_custom_call.1} parent=31 // pred_check
          %p267 = pneg %p121
        $region42: #{tpu_custom_call.1} parent=31 // pred_check_branch
          %269 = sbr.rel (%p267) target = $region44
        $region43: #{tpu_custom_call.1} parent=31 // pred_region
          %270 = dma.done %s263, 2048
        $region44: #{tpu_custom_call.1} parent=31 // pred_fallthru
          _
        %s271 = sand.u32 %s52, 1
        %s272 = scalar_lea.sflag [#allocation6], %s271
        %s273 = sand.u32 %s52, 1
        %s274 = smul.addr %s273, 128
        %s275 = scalar_lea.vmem [#allocation5], %s274
        %p276 = pneg %p65
        %p277 = pneg %p62
        %s278 = sand.u32 %s23, 1
        %s279 = scalar_lea.sflag [#allocation9], %s278
        %s280 = sand.u32 %s80, 1
        %s281 = smul.addr %s280, 128
        %s282 = scalar_lea.vmem [#allocation8], %s281
        %p283 = pneg %p93
        %p284 = pneg %p90
        %s285 = sand.u32 %s23, 1
        %s286 = scalar_lea.sflag [#allocation9], %s285
        %s287 = sand.u32 %s108, 1
        %s288 = smul.addr %s287, 128
        %s289 = scalar_lea.vmem [#allocation10], %s288
        %p290 = pneg %p121
        %p291 = pneg %p118
        %p292 = pneg %p149
        %p293 = pneg %p146
        %s294 = sand.u32 %s136, 1
        %s295 = scalar_lea.sflag [#allocation7], %s294
        %s296 = sand.u32 %s136, 1
        %s297 = smul.addr %s296, 64
        %s298 = scalar_lea.vmem [#allocation11], %s297
        %s299 = smul.u32 4, %s29
        %s300 = smul.u32 4, %s30
        %s301 = smul.u32 4, %s30
        %s302 = smul.u32 4, %s29
        %p303 = scmp.eq.s32.totalorder %s30, 0
        // Predicated region
        $region45: #{tpu_custom_call.1} parent=31 // pred_check
          %p304 = pneg %p303
        $region46: #{tpu_custom_call.1} parent=31 // pred_check_branch
          %306 = sbr.rel (%p304) target = $region48
        $region47: #{tpu_custom_call.1} parent=31 // pred_region
          %vm307 = vcmask 7168
          %308 = vst.msk [vmem:[#allocation2] sm:$0xff] %vm307, -inf
          %309 = vst.msk [vmem:[#allocation2 + $0x8] sm:$0xff] %vm307, -inf
          %310 = vst.msk [vmem:[#allocation2 + $0x10] sm:$0xff] %vm307, -inf
          %311 = vst.msk [vmem:[#allocation2 + $0x18] sm:$0xff] %vm307, -inf
          %312 = vst.msk [vmem:[#allocation2 + $0x20] sm:$0xff] %vm307, -inf
          %313 = vst.msk [vmem:[#allocation2 + $0x28] sm:$0xff] %vm307, -inf
          %314 = vst.msk [vmem:[#allocation2 + $0x30] sm:$0xff] %vm307, -inf
          %315 = vst.msk [vmem:[#allocation2 + $0x38] sm:$0xff] %vm307, -inf
          %316 = vst.msk [vmem:[#allocation2 + $0x40] sm:$0xff] %vm307, -inf
          %317 = vst.msk [vmem:[#allocation2 + $0x48] sm:$0xff] %vm307, -inf
          %318 = vst.msk [vmem:[#allocation2 + $0x50] sm:$0xff] %vm307, -inf
          %319 = vst.msk [vmem:[#allocation2 + $0x58] sm:$0xff] %vm307, -inf
          %320 = vst.msk [vmem:[#allocation2 + $0x60] sm:$0xff] %vm307, -inf
          %321 = vst.msk [vmem:[#allocation2 + $0x68] sm:$0xff] %vm307, -inf
          %322 = vst.msk [vmem:[#allocation2 + $0x70] sm:$0xff] %vm307, -inf
          %323 = vst.msk [vmem:[#allocation2 + $0x78] sm:$0xff] %vm307, -inf
          %324 = vst.msk [vmem:[#allocation3] sm:$0xff] %vm307, 0.0
          %325 = vst.msk [vmem:[#allocation3 + $0x8] sm:$0xff] %vm307, 0.0
          %326 = vst.msk [vmem:[#allocation3 + $0x10] sm:$0xff] %vm307, 0.0
          %327 = vst.msk [vmem:[#allocation3 + $0x18] sm:$0xff] %vm307, 0.0
          %328 = vst.msk [vmem:[#allocation3 + $0x20] sm:$0xff] %vm307, 0.0
          %329 = vst.msk [vmem:[#allocation3 + $0x28] sm:$0xff] %vm307, 0.0
          %330 = vst.msk [vmem:[#allocation3 + $0x30] sm:$0xff] %vm307, 0.0
          %331 = vst.msk [vmem:[#allocation3 + $0x38] sm:$0xff] %vm307, 0.0
          %332 = vst.msk [vmem:[#allocation3 + $0x40] sm:$0xff] %vm307, 0.0
          %333 = vst.msk [vmem:[#allocation3 + $0x48] sm:$0xff] %vm307, 0.0
          %334 = vst.msk [vmem:[#allocation3 + $0x50] sm:$0xff] %vm307, 0.0
          %335 = vst.msk [vmem:[#allocation3 + $0x58] sm:$0xff] %vm307, 0.0
          %336 = vst.msk [vmem:[#allocation3 + $0x60] sm:$0xff] %vm307, 0.0
          %337 = vst.msk [vmem:[#allocation3 + $0x68] sm:$0xff] %vm307, 0.0
          %338 = vst.msk [vmem:[#allocation3 + $0x70] sm:$0xff] %vm307, 0.0
          %339 = vst.msk [vmem:[#allocation3 + $0x78] sm:$0xff] %vm307, 0.0
          %vm340 = vcmask 523264
          %341 = vst.msk [vmem:[#allocation4] sm:$0xff] %vm340, 0.0
          %342 = vst.msk [vmem:[#allocation4 + $0x8] sm:$0xff] %vm340, 0.0
          %343 = vst.msk [vmem:[#allocation4 + $0x10] sm:$0xff] %vm340, 0.0
          %344 = vst.msk [vmem:[#allocation4 + $0x18] sm:$0xff] %vm340, 0.0
          %345 = vst.msk [vmem:[#allocation4 + $0x20] sm:$0xff] %vm340, 0.0
          %346 = vst.msk [vmem:[#allocation4 + $0x28] sm:$0xff] %vm340, 0.0
          %347 = vst.msk [vmem:[#allocation4 + $0x30] sm:$0xff] %vm340, 0.0
          %348 = vst.msk [vmem:[#allocation4 + $0x38] sm:$0xff] %vm340, 0.0
          %349 = vst.msk [vmem:[#allocation4 + $0x40] sm:$0xff] %vm340, 0.0
          %350 = vst.msk [vmem:[#allocation4 + $0x48] sm:$0xff] %vm340, 0.0
          %351 = vst.msk [vmem:[#allocation4 + $0x50] sm:$0xff] %vm340, 0.0
          %352 = vst.msk [vmem:[#allocation4 + $0x58] sm:$0xff] %vm340, 0.0
          %353 = vst.msk [vmem:[#allocation4 + $0x60] sm:$0xff] %vm340, 0.0
          %354 = vst.msk [vmem:[#allocation4 + $0x68] sm:$0xff] %vm340, 0.0
          %355 = vst.msk [vmem:[#allocation4 + $0x70] sm:$0xff] %vm340, 0.0
          %356 = vst.msk [vmem:[#allocation4 + $0x78] sm:$0xff] %vm340, 0.0
        $region48: #{tpu_custom_call.1} parent=31 // pred_fallthru
          _
        %v357 = vld [vmem:[%s248] sm:$0xff]
        %v358 = vld [vmem:[%s248 + $0x8] sm:$0xff]
        %v359 = vld [vmem:[%s248 + $0x10] sm:$0xff]
        %v360 = vld [vmem:[%s248 + $0x18] sm:$0xff]
        %v361 = vld [vmem:[%s248 + $0x20] sm:$0xff]
        %v362 = vld [vmem:[%s248 + $0x28] sm:$0xff]
        %v363 = vld [vmem:[%s248 + $0x30] sm:$0xff]
        %v364 = vld [vmem:[%s248 + $0x38] sm:$0xff]
        %v365 = vld [vmem:[%s248 + $0x40] sm:$0xff]
        %v366 = vld [vmem:[%s248 + $0x48] sm:$0xff]
        %v367 = vld [vmem:[%s248 + $0x50] sm:$0xff]
        %v368 = vld [vmem:[%s248 + $0x58] sm:$0xff]
        %v369 = vld [vmem:[%s248 + $0x60] sm:$0xff]
        %v370 = vld [vmem:[%s248 + $0x68] sm:$0xff]
        %v371 = vld [vmem:[%s248 + $0x70] sm:$0xff]
        %v372 = vld [vmem:[%s248 + $0x78] sm:$0xff]
        %v373 = vmul.f32 %v357, 0.125
        %v374 = vmul.f32 %v358, 0.125
        %v375 = vmul.f32 %v359, 0.125
        %v376 = vmul.f32 %v360, 0.125
        %v377 = vmul.f32 %v361, 0.125
        %v378 = vmul.f32 %v362, 0.125
        %v379 = vmul.f32 %v363, 0.125
        %v380 = vmul.f32 %v364, 0.125
        %v381 = vmul.f32 %v365, 0.125
        %v382 = vmul.f32 %v366, 0.125
        %v383 = vmul.f32 %v367, 0.125
        %v384 = vmul.f32 %v368, 0.125
        %v385 = vmul.f32 %v369, 0.125
        %v386 = vmul.f32 %v370, 0.125
        %v387 = vmul.f32 %v371, 0.125
        %v388 = vmul.f32 %v372, 0.125
        %v389 = vld [vmem:[%s257] sm:$0xff]
        %v390 = vld [vmem:[%s257 + $0x8] sm:$0xff]
        %v391 = vld [vmem:[%s257 + $0x10] sm:$0xff]
        %v392 = vld [vmem:[%s257 + $0x18] sm:$0xff]
        %v393 = vld [vmem:[%s257 + $0x20] sm:$0xff]
        %v394 = vld [vmem:[%s257 + $0x28] sm:$0xff]
        %v395 = vld [vmem:[%s257 + $0x30] sm:$0xff]
        %v396 = vld [vmem:[%s257 + $0x38] sm:$0xff]
        %v397 = vld [vmem:[%s257 + $0x40] sm:$0xff]
        %v398 = vld [vmem:[%s257 + $0x48] sm:$0xff]
        %v399 = vld [vmem:[%s257 + $0x50] sm:$0xff]
        %v400 = vld [vmem:[%s257 + $0x58] sm:$0xff]
        %v401 = vld [vmem:[%s257 + $0x60] sm:$0xff]
        %v402 = vld [vmem:[%s257 + $0x68] sm:$0xff]
        %v403 = vld [vmem:[%s257 + $0x70] sm:$0xff]
        %v404 = vld [vmem:[%s257 + $0x78] sm:$0xff]
        %vm405 = vcmask 523264
        %v407 = vsel %vm405, %v373, 0
        %v410 = vsel %vm405, %v374, 0
        %v413 = vsel %vm405, %v375, 0
        %v416 = vsel %vm405, %v376, 0
        %v419 = vsel %vm405, %v389, 0
        %v422 = vsel %vm405, %v390, 0
        %v425 = vsel %vm405, %v391, 0
        %v428 = vsel %vm405, %v392, 0
        %430 = vmatprep.subr.mxu0 0.0
        %431 = vmatpush1.xpose.msra.mxu0 0.0
        %432 = vmatprep.subr.mxu0 0.0
        %433 = vmatpush1.xpose.msra.mxu0 0.0
        %434 = vmatprep.subr.mxu0 0.0
        %435 = vmatpush1.xpose.msra.mxu0 0.0
        %436 = vmatprep.subr.mxu0 0.0
        %437 = vmatpush1.xpose.msra.mxu0 0.0
        %438 = vmatprep.subr.mxu0 0.0
        %439 = vmatpush1.xpose.msra.mxu0 0.0
        %440 = vmatprep.subr.mxu0 0.0
        %441 = vmatpush1.xpose.msra.mxu0 0.0
        %442 = vmatprep.subr.mxu0 0.0
        %443 = vmatpush1.xpose.msra.mxu0 0.0
        %444 = vmatprep.subr.mxu0 0.0
        %445 = vmatpush1.xpose.msra.mxu0 0.0
        %446 = vmatprep.subr.mxu0 0.0
        %447 = vmatpush1.xpose.msra.mxu0 0.0
        %448 = vmatprep.subr.mxu0 0.0
        %449 = vmatpush1.xpose.msra.mxu0 0.0
        %450 = vmatprep.subr.mxu0 0.0
        %451 = vmatpush1.xpose.msra.mxu0 0.0
        %452 = vmatprep.subr.mxu0 0.0
        %453 = vmatpush1.xpose.msra.mxu0 0.0
        %454 = vmatprep.subr.mxu0 0.0
        %455 = vmatpush1.xpose.msra.mxu0 %v428
        %456 = vmatprep.subr.mxu0 0.0
        %457 = vmatpush1.xpose.msra.mxu0 %v425
        %458 = vmatprep.subr.mxu0 0.0
        %459 = vmatpush1.xpose.msra.mxu0 %v422
        %460 = vmatprep.subr.mxu0 0.0
        %461 = vmatpush1.xpose.msra.mxu0 %v419
        %462 = vmatprep.subr.mxu0 0.0
        %463 = vmatpush2.xpose.msra.mxu0 0.0
        %464 = vmatprep.subr.mxu0 0.0
        %465 = vmatpush2.xpose.msra.mxu0 0.0
        %466 = vmatprep.subr.mxu0 0.0
        %467 = vmatpush2.xpose.msra.mxu0 0.0
        %468 = vmatprep.subr.mxu0 0.0
        %469 = vmatpush2.xpose.msra.mxu0 0.0
        %470 = vmatprep.subr.mxu0 0.0
        %471 = vmatpush2.xpose.msra.mxu0 0.0
        %472 = vmatprep.subr.mxu0 0.0
        %473 = vmatpush2.xpose.msra.mxu0 0.0
        %474 = vmatprep.subr.mxu0 0.0
        %475 = vmatpush2.xpose.msra.mxu0 0.0
        %476 = vmatprep.subr.mxu0 0.0
        %477 = vmatpush2.xpose.msra.mxu0 0.0
        %478 = vmatprep.subr.mxu0 0.0
        %479 = vmatpush2.xpose.msra.mxu0 0.0
        %480 = vmatprep.subr.mxu0 0.0
        %481 = vmatpush2.xpose.msra.mxu0 0.0
        %482 = vmatprep.subr.mxu0 0.0
        %483 = vmatpush2.xpose.msra.mxu0 0.0
        %484 = vmatprep.subr.mxu0 0.0
        %485 = vmatpush2.xpose.msra.mxu0 0.0
        %486 = vmatprep.subr.mxu0 0.0
        %487 = vmatpush2.xpose.msra.mxu0 0.0
        %488 = vmatprep.subr.mxu0 0.0
        %489 = vmatpush2.xpose.msra.mxu0 0.0
        %490 = vmatprep.subr.mxu0 0.0
        %491 = vmatpush2.xpose.msra.mxu0 0.0
        %492 = vmatprep.subr.mxu0 0.0
        %493 = vmatpush2.xpose.msra.mxu0 0.0
        %494 = vmatprep.mubr.f32.mxu0 0.0
        %495 = vmatmul.mubr.f32.gmra.mxu0 %v407
        %v496 = vpop.f32.mrf.mxu0
        %v497 = vadd.f32 0.0, %v496
        %v498 = vpop.f32.mrf.mxu0
        %499 = vmatprep.mubr.f32.mxu0 0.0
        %500 = vmatmul.mubr.f32.gmra.mxu0 %v410
        %v501 = vpop.f32.mrf.mxu0
        %v502 = vadd.f32 0.0, %v501
        %v503 = vpop.f32.mrf.mxu0
        %504 = vmatprep.mubr.f32.mxu0 0.0
        %505 = vmatmul.mubr.f32.gmra.mxu0 %v413
        %v506 = vpop.f32.mrf.mxu0
        %v507 = vadd.f32 0.0, %v506
        %v508 = vpop.f32.mrf.mxu0
        %509 = vmatprep.mubr.f32.mxu0 0.0
        %510 = vmatmul.mubr.f32.gmra.mxu0 %v416
        %v511 = vpop.f32.mrf.mxu0
        %v512 = vadd.f32 0.0, %v511
        %v513 = vpop.f32.mrf.mxu0
        %514 = vdwg.mxu0
        %v516 = vsel %vm405, %v377, 0
        %v519 = vsel %vm405, %v378, 0
        %v522 = vsel %vm405, %v379, 0
        %v525 = vsel %vm405, %v380, 0
        %v528 = vsel %vm405, %v393, 0
        %v531 = vsel %vm405, %v394, 0
        %v534 = vsel %vm405, %v395, 0
        %v537 = vsel %vm405, %v396, 0
        %539 = vmatprep.subr.mxu0 0.0
        %540 = vmatpush1.xpose.msra.mxu0 0.0
        %541 = vmatprep.subr.mxu0 0.0
        %542 = vmatpush1.xpose.msra.mxu0 0.0
        %543 = vmatprep.subr.mxu0 0.0
        %544 = vmatpush1.xpose.msra.mxu0 0.0
        %545 = vmatprep.subr.mxu0 0.0
        %546 = vmatpush1.xpose.msra.mxu0 0.0
        %547 = vmatprep.subr.mxu0 0.0
        %548 = vmatpush1.xpose.msra.mxu0 0.0
        %549 = vmatprep.subr.mxu0 0.0
        %550 = vmatpush1.xpose.msra.mxu0 0.0
        %551 = vmatprep.subr.mxu0 0.0
        %552 = vmatpush1.xpose.msra.mxu0 0.0
        %553 = vmatprep.subr.mxu0 0.0
        %554 = vmatpush1.xpose.msra.mxu0 0.0
        %555 = vmatprep.subr.mxu0 0.0
        %556 = vmatpush1.xpose.msra.mxu0 0.0
        %557 = vmatprep.subr.mxu0 0.0
        %558 = vmatpush1.xpose.msra.mxu0 0.0
        %559 = vmatprep.subr.mxu0 0.0
        %560 = vmatpush1.xpose.msra.mxu0 0.0
        %561 = vmatprep.subr.mxu0 0.0
        %562 = vmatpush1.xpose.msra.mxu0 0.0
        %563 = vmatprep.subr.mxu0 0.0
        %564 = vmatpush1.xpose.msra.mxu0 %v537
        %565 = vmatprep.subr.mxu0 0.0
        %566 = vmatpush1.xpose.msra.mxu0 %v534
        %567 = vmatprep.subr.mxu0 0.0
        %568 = vmatpush1.xpose.msra.mxu0 %v531
        %569 = vmatprep.subr.mxu0 0.0
        %570 = vmatpush1.xpose.msra.mxu0 %v528
        %571 = vmatprep.subr.mxu0 0.0
        %572 = vmatpush2.xpose.msra.mxu0 0.0
        %573 = vmatprep.subr.mxu0 0.0
        %574 = vmatpush2.xpose.msra.mxu0 0.0
        %575 = vmatprep.subr.mxu0 0.0
        %576 = vmatpush2.xpose.msra.mxu0 0.0
        %577 = vmatprep.subr.mxu0 0.0
        %578 = vmatpush2.xpose.msra.mxu0 0.0
        %579 = vmatprep.subr.mxu0 0.0
        %580 = vmatpush2.xpose.msra.mxu0 0.0
        %581 = vmatprep.subr.mxu0 0.0
        %582 = vmatpush2.xpose.msra.mxu0 0.0
        %583 = vmatprep.subr.mxu0 0.0
        %584 = vmatpush2.xpose.msra.mxu0 0.0
        %585 = vmatprep.subr.mxu0 0.0
        %586 = vmatpush2.xpose.msra.mxu0 0.0
        %587 = vmatprep.subr.mxu0 0.0
        %588 = vmatpush2.xpose.msra.mxu0 0.0
        %589 = vmatprep.subr.mxu0 0.0
        %590 = vmatpush2.xpose.msra.mxu0 0.0
        %591 = vmatprep.subr.mxu0 0.0
        %592 = vmatpush2.xpose.msra.mxu0 0.0
        %593 = vmatprep.subr.mxu0 0.0
        %594 = vmatpush2.xpose.msra.mxu0 0.0
        %595 = vmatprep.subr.mxu0 0.0
        %596 = vmatpush2.xpose.msra.mxu0 0.0
        %597 = vmatprep.subr.mxu0 0.0
        %598 = vmatpush2.xpose.msra.mxu0 0.0
        %599 = vmatprep.subr.mxu0 0.0
        %600 = vmatpush2.xpose.msra.mxu0 0.0
        %601 = vmatprep.subr.mxu0 0.0
        %602 = vmatpush2.xpose.msra.mxu0 0.0
        %603 = vmatprep.mubr.f32.mxu0 0.0
        %604 = vmatmul.mubr.f32.gmra.mxu0 %v516
        %v605 = vpop.f32.mrf.mxu0
        %v606 = vadd.f32 0.0, %v605
        %v607 = vpop.f32.mrf.mxu0
        %608 = vmatprep.mubr.f32.mxu0 0.0
        %609 = vmatmul.mubr.f32.gmra.mxu0 %v519
        %v610 = vpop.f32.mrf.mxu0
        %v611 = vadd.f32 0.0, %v610
        %v612 = vpop.f32.mrf.mxu0
        %613 = vmatprep.mubr.f32.mxu0 0.0
        %614 = vmatmul.mubr.f32.gmra.mxu0 %v522
        %v615 = vpop.f32.mrf.mxu0
        %v616 = vadd.f32 0.0, %v615
        %v617 = vpop.f32.mrf.mxu0
        %618 = vmatprep.mubr.f32.mxu0 0.0
        %619 = vmatmul.mubr.f32.gmra.mxu0 %v525
        %v620 = vpop.f32.mrf.mxu0
        %v621 = vadd.f32 0.0, %v620
        %v622 = vpop.f32.mrf.mxu0
        %623 = vdwg.mxu0
        %v625 = vsel %vm405, %v381, 0
        %v628 = vsel %vm405, %v382, 0
        %v631 = vsel %vm405, %v383, 0
        %v634 = vsel %vm405, %v384, 0
        %v637 = vsel %vm405, %v397, 0
        %v640 = vsel %vm405, %v398, 0
        %v643 = vsel %vm405, %v399, 0
        %v646 = vsel %vm405, %v400, 0
        %648 = vmatprep.subr.mxu0 0.0
        %649 = vmatpush1.xpose.msra.mxu0 0.0
        %650 = vmatprep.subr.mxu0 0.0
        %651 = vmatpush1.xpose.msra.mxu0 0.0
        %652 = vmatprep.subr.mxu0 0.0
        %653 = vmatpush1.xpose.msra.mxu0 0.0
        %654 = vmatprep.subr.mxu0 0.0
        %655 = vmatpush1.xpose.msra.mxu0 0.0
        %656 = vmatprep.subr.mxu0 0.0
        %657 = vmatpush1.xpose.msra.mxu0 0.0
        %658 = vmatprep.subr.mxu0 0.0
        %659 = vmatpush1.xpose.msra.mxu0 0.0
        %660 = vmatprep.subr.mxu0 0.0
        %661 = vmatpush1.xpose.msra.mxu0 0.0
        %662 = vmatprep.subr.mxu0 0.0
        %663 = vmatpush1.xpose.msra.mxu0 0.0
        %664 = vmatprep.subr.mxu0 0.0
        %665 = vmatpush1.xpose.msra.mxu0 0.0
        %666 = vmatprep.subr.mxu0 0.0
        %667 = vmatpush1.xpose.msra.mxu0 0.0
        %668 = vmatprep.subr.mxu0 0.0
        %669 = vmatpush1.xpose.msra.mxu0 0.0
        %670 = vmatprep.subr.mxu0 0.0
        %671 = vmatpush1.xpose.msra.mxu0 0.0
        %672 = vmatprep.subr.mxu0 0.0
        %673 = vmatpush1.xpose.msra.mxu0 %v646
        %674 = vmatprep.subr.mxu0 0.0
        %675 = vmatpush1.xpose.msra.mxu0 %v643
        %676 = vmatprep.subr.mxu0 0.0
        %677 = vmatpush1.xpose.msra.mxu0 %v640
        %678 = vmatprep.subr.mxu0 0.0
        %679 = vmatpush1.xpose.msra.mxu0 %v637
        %680 = vmatprep.subr.mxu0 0.0
        %681 = vmatpush2.xpose.msra.mxu0 0.0
        %682 = vmatprep.subr.mxu0 0.0
        %683 = vmatpush2.xpose.msra.mxu0 0.0
        %684 = vmatprep.subr.mxu0 0.0
        %685 = vmatpush2.xpose.msra.mxu0 0.0
        %686 = vmatprep.subr.mxu0 0.0
        %687 = vmatpush2.xpose.msra.mxu0 0.0
        %688 = vmatprep.subr.mxu0 0.0
        %689 = vmatpush2.xpose.msra.mxu0 0.0
        %690 = vmatprep.subr.mxu0 0.0
        %691 = vmatpush2.xpose.msra.mxu0 0.0
        %692 = vmatprep.subr.mxu0 0.0
        %693 = vmatpush2.xpose.msra.mxu0 0.0
        %694 = vmatprep.subr.mxu0 0.0
        %695 = vmatpush2.xpose.msra.mxu0 0.0
        %696 = vmatprep.subr.mxu0 0.0
        %697 = vmatpush2.xpose.msra.mxu0 0.0
        %698 = vmatprep.subr.mxu0 0.0
        %699 = vmatpush2.xpose.msra.mxu0 0.0
        %700 = vmatprep.subr.mxu0 0.0
        %701 = vmatpush2.xpose.msra.mxu0 0.0
        %702 = vmatprep.subr.mxu0 0.0
        %703 = vmatpush2.xpose.msra.mxu0 0.0
        %704 = vmatprep.subr.mxu0 0.0
        %705 = vmatpush2.xpose.msra.mxu0 0.0
        %706 = vmatprep.subr.mxu0 0.0
        %707 = vmatpush2.xpose.msra.mxu0 0.0
        %708 = vmatprep.subr.mxu0 0.0
        %709 = vmatpush2.xpose.msra.mxu0 0.0
        %710 = vmatprep.subr.mxu0 0.0
        %711 = vmatpush2.xpose.msra.mxu0 0.0
        %712 = vmatprep.mubr.f32.mxu0 0.0
        %713 = vmatmul.mubr.f32.gmra.mxu0 %v625
        %v714 = vpop.f32.mrf.mxu0
        %v715 = vadd.f32 0.0, %v714
        %v716 = vpop.f32.mrf.mxu0
        %717 = vmatprep.mubr.f32.mxu0 0.0
        %718 = vmatmul.mubr.f32.gmra.mxu0 %v628
        %v719 = vpop.f32.mrf.mxu0
        %v720 = vadd.f32 0.0, %v719
        %v721 = vpop.f32.mrf.mxu0
        %722 = vmatprep.mubr.f32.mxu0 0.0
        %723 = vmatmul.mubr.f32.gmra.mxu0 %v631
        %v724 = vpop.f32.mrf.mxu0
        %v725 = vadd.f32 0.0, %v724
        %v726 = vpop.f32.mrf.mxu0
        %727 = vmatprep.mubr.f32.mxu0 0.0
        %728 = vmatmul.mubr.f32.gmra.mxu0 %v634
        %v729 = vpop.f32.mrf.mxu0
        %v730 = vadd.f32 0.0, %v729
        %v731 = vpop.f32.mrf.mxu0
        %732 = vdwg.mxu0
        %v734 = vsel %vm405, %v385, 0
        %v737 = vsel %vm405, %v386, 0
        %v740 = vsel %vm405, %v387, 0
        %v743 = vsel %vm405, %v388, 0
        %v746 = vsel %vm405, %v401, 0
        %v749 = vsel %vm405, %v402, 0
        %v752 = vsel %vm405, %v403, 0
        %v755 = vsel %vm405, %v404, 0
        %757 = vmatprep.subr.mxu0 0.0
        %758 = vmatpush1.xpose.msra.mxu0 0.0
        %759 = vmatprep.subr.mxu0 0.0
        %760 = vmatpush1.xpose.msra.mxu0 0.0
        %761 = vmatprep.subr.mxu0 0.0
        %762 = vmatpush1.xpose.msra.mxu0 0.0
        %763 = vmatprep.subr.mxu0 0.0
        %764 = vmatpush1.xpose.msra.mxu0 0.0
        %765 = vmatprep.subr.mxu0 0.0
        %766 = vmatpush1.xpose.msra.mxu0 0.0
        %767 = vmatprep.subr.mxu0 0.0
        %768 = vmatpush1.xpose.msra.mxu0 0.0
        %769 = vmatprep.subr.mxu0 0.0
        %770 = vmatpush1.xpose.msra.mxu0 0.0
        %771 = vmatprep.subr.mxu0 0.0
        %772 = vmatpush1.xpose.msra.mxu0 0.0
        %773 = vmatprep.subr.mxu0 0.0
        %774 = vmatpush1.xpose.msra.mxu0 0.0
        %775 = vmatprep.subr.mxu0 0.0
        %776 = vmatpush1.xpose.msra.mxu0 0.0
        %777 = vmatprep.subr.mxu0 0.0
        %778 = vmatpush1.xpose.msra.mxu0 0.0
        %779 = vmatprep.subr.mxu0 0.0
        %780 = vmatpush1.xpose.msra.mxu0 0.0
        %781 = vmatprep.subr.mxu0 0.0
        %782 = vmatpush1.xpose.msra.mxu0 %v755
        %783 = vmatprep.subr.mxu0 0.0
        %784 = vmatpush1.xpose.msra.mxu0 %v752
        %785 = vmatprep.subr.mxu0 0.0
        %786 = vmatpush1.xpose.msra.mxu0 %v749
        %787 = vmatprep.subr.mxu0 0.0
        %788 = vmatpush1.xpose.msra.mxu0 %v746
        %789 = vmatprep.subr.mxu0 0.0
        %790 = vmatpush2.xpose.msra.mxu0 0.0
        %791 = vmatprep.subr.mxu0 0.0
        %792 = vmatpush2.xpose.msra.mxu0 0.0
        %793 = vmatprep.subr.mxu0 0.0
        %794 = vmatpush2.xpose.msra.mxu0 0.0
        %795 = vmatprep.subr.mxu0 0.0
        %796 = vmatpush2.xpose.msra.mxu0 0.0
        %797 = vmatprep.subr.mxu0 0.0
        %798 = vmatpush2.xpose.msra.mxu0 0.0
        %799 = vmatprep.subr.mxu0 0.0
        %800 = vmatpush2.xpose.msra.mxu0 0.0
        %801 = vmatprep.subr.mxu0 0.0
        %802 = vmatpush2.xpose.msra.mxu0 0.0
        %803 = vmatprep.subr.mxu0 0.0
        %804 = vmatpush2.xpose.msra.mxu0 0.0
        %805 = vmatprep.subr.mxu0 0.0
        %806 = vmatpush2.xpose.msra.mxu0 0.0
        %807 = vmatprep.subr.mxu0 0.0
        %808 = vmatpush2.xpose.msra.mxu0 0.0
        %809 = vmatprep.subr.mxu0 0.0
        %810 = vmatpush2.xpose.msra.mxu0 0.0
        %811 = vmatprep.subr.mxu0 0.0
        %812 = vmatpush2.xpose.msra.mxu0 0.0
        %813 = vmatprep.subr.mxu0 0.0
        %814 = vmatpush2.xpose.msra.mxu0 0.0
        %815 = vmatprep.subr.mxu0 0.0
        %816 = vmatpush2.xpose.msra.mxu0 0.0
        %817 = vmatprep.subr.mxu0 0.0
        %818 = vmatpush2.xpose.msra.mxu0 0.0
        %819 = vmatprep.subr.mxu0 0.0
        %820 = vmatpush2.xpose.msra.mxu0 0.0
        %821 = vmatprep.mubr.f32.mxu0 0.0
        %822 = vmatmul.mubr.f32.gmra.mxu0 %v734
        %v823 = vpop.f32.mrf.mxu0
        %v824 = vadd.f32 0.0, %v823
        %v825 = vpop.f32.mrf.mxu0
        %826 = vmatprep.mubr.f32.mxu0 0.0
        %827 = vmatmul.mubr.f32.gmra.mxu0 %v737
        %v828 = vpop.f32.mrf.mxu0
        %v829 = vadd.f32 0.0, %v828
        %v830 = vpop.f32.mrf.mxu0
        %831 = vmatprep.mubr.f32.mxu0 0.0
        %832 = vmatmul.mubr.f32.gmra.mxu0 %v740
        %v833 = vpop.f32.mrf.mxu0
        %v834 = vadd.f32 0.0, %v833
        %v835 = vpop.f32.mrf.mxu0
        %836 = vmatprep.mubr.f32.mxu0 0.0
        %837 = vmatmul.mubr.f32.gmra.mxu0 %v743
        %v838 = vpop.f32.mrf.mxu0
        %v839 = vadd.f32 0.0, %v838
        %v840 = vpop.f32.mrf.mxu0
        %841 = vdwg.mxu0
        %v842 = vld [vmem:[#allocation2] sm:$0xff]
        %v843 = vld [vmem:[#allocation2 + $0x8] sm:$0xff]
        %v844 = vld [vmem:[#allocation2 + $0x10] sm:$0xff]
        %v845 = vld [vmem:[#allocation2 + $0x18] sm:$0xff]
        %v846 = vld [vmem:[#allocation2 + $0x20] sm:$0xff]
        %v847 = vld [vmem:[#allocation2 + $0x28] sm:$0xff]
        %v848 = vld [vmem:[#allocation2 + $0x30] sm:$0xff]
        %v849 = vld [vmem:[#allocation2 + $0x38] sm:$0xff]
        %v850 = vld [vmem:[#allocation2 + $0x40] sm:$0xff]
        %v851 = vld [vmem:[#allocation2 + $0x48] sm:$0xff]
        %v852 = vld [vmem:[#allocation2 + $0x50] sm:$0xff]
        %v853 = vld [vmem:[#allocation2 + $0x58] sm:$0xff]
        %v854 = vld [vmem:[#allocation2 + $0x60] sm:$0xff]
        %v855 = vld [vmem:[#allocation2 + $0x68] sm:$0xff]
        %v856 = vld [vmem:[#allocation2 + $0x70] sm:$0xff]
        %v857 = vld [vmem:[#allocation2 + $0x78] sm:$0xff]
        %vm858 = vcmask 261120
        %v859 = vsel %vm858, %v497, -inf
        %860 = vmax.xlane.f32.xlu0 %v859
        %v861 = vpop.xlane.xlu0 %860
        %v862 = vsel %vm858, %v502, -inf
        %863 = vmax.xlane.f32.xlu0 %v862
        %v864 = vpop.xlane.xlu0 %863
        %v865 = vsel %vm858, %v507, -inf
        %866 = vmax.xlane.f32.xlu0 %v865
        %v867 = vpop.xlane.xlu0 %866
        %v868 = vsel %vm858, %v512, -inf
        %869 = vmax.xlane.f32.xlu0 %v868
        %v870 = vpop.xlane.xlu0 %869
        %v871 = vsel %vm858, %v606, -inf
        %872 = vmax.xlane.f32.xlu0 %v871
        %v873 = vpop.xlane.xlu0 %872
        %v874 = vsel %vm858, %v611, -inf
        %875 = vmax.xlane.f32.xlu0 %v874
        %v876 = vpop.xlane.xlu0 %875
        %v877 = vsel %vm858, %v616, -inf
        %878 = vmax.xlane.f32.xlu0 %v877
        %v879 = vpop.xlane.xlu0 %878
        %v880 = vsel %vm858, %v621, -inf
        %881 = vmax.xlane.f32.xlu0 %v880
        %v882 = vpop.xlane.xlu0 %881
        %v883 = vsel %vm858, %v715, -inf
        %884 = vmax.xlane.f32.xlu0 %v883
        %v885 = vpop.xlane.xlu0 %884
        %v886 = vsel %vm858, %v720, -inf
        %887 = vmax.xlane.f32.xlu0 %v886
        %v888 = vpop.xlane.xlu0 %887
        %v889 = vsel %vm858, %v725, -inf
        %890 = vmax.xlane.f32.xlu0 %v889
        %v891 = vpop.xlane.xlu0 %890
        %v892 = vsel %vm858, %v730, -inf
        %893 = vmax.xlane.f32.xlu0 %v892
        %v894 = vpop.xlane.xlu0 %893
        %v895 = vsel %vm858, %v824, -inf
        %896 = vmax.xlane.f32.xlu0 %v895
        %v897 = vpop.xlane.xlu0 %896
        %v898 = vsel %vm858, %v829, -inf
        %899 = vmax.xlane.f32.xlu0 %v898
        %v900 = vpop.xlane.xlu0 %899
        %v901 = vsel %vm858, %v834, -inf
        %902 = vmax.xlane.f32.xlu0 %v901
        %v903 = vpop.xlane.xlu0 %902
        %v904 = vsel %vm858, %v839, -inf
        %905 = vmax.xlane.f32.xlu0 %v904
        %v906 = vpop.xlane.xlu0 %905
        %v907 = vmax.f32 %v842, %v861
        %v908 = vmax.f32 %v843, %v864
        %v909 = vmax.f32 %v844, %v867
        %v910 = vmax.f32 %v845, %v870
        %v911 = vmax.f32 %v846, %v873
        %v912 = vmax.f32 %v847, %v876
        %v913 = vmax.f32 %v848, %v879
        %v914 = vmax.f32 %v849, %v882
        %v915 = vmax.f32 %v850, %v885
        %v916 = vmax.f32 %v851, %v888
        %v917 = vmax.f32 %v852, %v891
        %v918 = vmax.f32 %v853, %v894
        %v919 = vmax.f32 %v854, %v897
        %v920 = vmax.f32 %v855, %v900
        %v921 = vmax.f32 %v856, %v903
        %v922 = vmax.f32 %v857, %v906
        %v923 = vsub.f32 %v842, %v907
        %v924 = vsub.f32 %v843, %v908
        %v925 = vsub.f32 %v844, %v909
        %v926 = vsub.f32 %v845, %v910
        %v927 = vsub.f32 %v846, %v911
        %v928 = vsub.f32 %v847, %v912
        %v929 = vsub.f32 %v848, %v913
        %v930 = vsub.f32 %v849, %v914
        %v931 = vsub.f32 %v850, %v915
        %v932 = vsub.f32 %v851, %v916
        %v933 = vsub.f32 %v852, %v917
        %v934 = vsub.f32 %v853, %v918
        %v935 = vsub.f32 %v854, %v919
        %v936 = vsub.f32 %v855, %v920
        %v937 = vsub.f32 %v856, %v921
        %v938 = vsub.f32 %v857, %v922
        %v939 = vmul.f32 %v923, 1.442695
        %v940 = vpow.pop %v939
        %v941 = vmul.f32 %v924, 1.442695
        %v942 = vpow.pop %v941
        %v943 = vmul.f32 %v925, 1.442695
        %v944 = vpow.pop %v943
        %v945 = vmul.f32 %v926, 1.442695
        %v946 = vpow.pop %v945
        %v947 = vmul.f32 %v927, 1.442695
        %v948 = vpow.pop %v947
        %v949 = vmul.f32 %v928, 1.442695
        %v950 = vpow.pop %v949
        %v951 = vmul.f32 %v929, 1.442695
        %v952 = vpow.pop %v951
        %v953 = vmul.f32 %v930, 1.442695
        %v954 = vpow.pop %v953
        %v955 = vmul.f32 %v931, 1.442695
        %v956 = vpow.pop %v955
        %v957 = vmul.f32 %v932, 1.442695
        %v958 = vpow.pop %v957
        %v959 = vmul.f32 %v933, 1.442695
        %v960 = vpow.pop %v959
        %v961 = vmul.f32 %v934, 1.442695
        %v962 = vpow.pop %v961
        %v963 = vmul.f32 %v935, 1.442695
        %v964 = vpow.pop %v963
        %v965 = vmul.f32 %v936, 1.442695
        %v966 = vpow.pop %v965
        %v967 = vmul.f32 %v937, 1.442695
        %v968 = vpow.pop %v967
        %v969 = vmul.f32 %v938, 1.442695
        %v970 = vpow.pop %v969
        %972 = vset.pattern.permute.xlu0 0
        %973 = vperm.xlu0 %972, %v907
        %v974 = vpop.permute.xlu0 %973
        %977 = vset.pattern.permute.xlu0 0
        %978 = vperm.xlu0 %977, %v908
        %v979 = vpop.permute.xlu0 %978
        %982 = vset.pattern.permute.xlu0 0
        %983 = vperm.xlu0 %982, %v909
        %v984 = vpop.permute.xlu0 %983
        %987 = vset.pattern.permute.xlu0 0
        %988 = vperm.xlu0 %987, %v910
        %v989 = vpop.permute.xlu0 %988
        %992 = vset.pattern.permute.xlu0 0
        %993 = vperm.xlu0 %992, %v911
        %v994 = vpop.permute.xlu0 %993
        %997 = vset.pattern.permute.xlu0 0
        %998 = vperm.xlu0 %997, %v912
        %v999 = vpop.permute.xlu0 %998
        %1002 = vset.pattern.permute.xlu0 0
        %1003 = vperm.xlu0 %1002, %v913
        %v1004 = vpop.permute.xlu0 %1003
        %1007 = vset.pattern.permute.xlu0 0
        %1008 = vperm.xlu0 %1007, %v914
        %v1009 = vpop.permute.xlu0 %1008
        %1012 = vset.pattern.permute.xlu0 0
        %1013 = vperm.xlu0 %1012, %v915
        %v1014 = vpop.permute.xlu0 %1013
        %1017 = vset.pattern.permute.xlu0 0
        %1018 = vperm.xlu0 %1017, %v916
        %v1019 = vpop.permute.xlu0 %1018
        %1022 = vset.pattern.permute.xlu0 0
        %1023 = vperm.xlu0 %1022, %v917
        %v1024 = vpop.permute.xlu0 %1023
        %1027 = vset.pattern.permute.xlu0 0
        %1028 = vperm.xlu0 %1027, %v918
        %v1029 = vpop.permute.xlu0 %1028
        %1032 = vset.pattern.permute.xlu0 0
        %1033 = vperm.xlu0 %1032, %v919
        %v1034 = vpop.permute.xlu0 %1033
        %1037 = vset.pattern.permute.xlu0 0
        %1038 = vperm.xlu0 %1037, %v920
        %v1039 = vpop.permute.xlu0 %1038
        %1042 = vset.pattern.permute.xlu0 0
        %1043 = vperm.xlu0 %1042, %v921
        %v1044 = vpop.permute.xlu0 %1043
        %1047 = vset.pattern.permute.xlu0 0
        %1048 = vperm.xlu0 %1047, %v922
        %v1049 = vpop.permute.xlu0 %1048
        %v1051 = vsub.f32 %v497, %v974
        %v1052 = vsub.f32 %v502, %v979
        %v1053 = vsub.f32 %v507, %v984
        %v1054 = vsub.f32 %v512, %v989
        %v1055 = vsub.f32 %v606, %v994
        %v1056 = vsub.f32 %v611, %v999
        %v1057 = vsub.f32 %v616, %v1004
        %v1058 = vsub.f32 %v621, %v1009
        %v1059 = vsub.f32 %v715, %v1014
        %v1060 = vsub.f32 %v720, %v1019
        %v1061 = vsub.f32 %v725, %v1024
        %v1062 = vsub.f32 %v730, %v1029
        %v1063 = vsub.f32 %v824, %v1034
        %v1064 = vsub.f32 %v829, %v1039
        %v1065 = vsub.f32 %v834, %v1044
        %v1066 = vsub.f32 %v839, %v1049
        %v1067 = vmul.f32 %v1051, 1.442695
        %v1068 = vpow.pop %v1067
        %v1069 = vmul.f32 %v1052, 1.442695
        %v1070 = vpow.pop %v1069
        %v1071 = vmul.f32 %v1053, 1.442695
        %v1072 = vpow.pop %v1071
        %v1073 = vmul.f32 %v1054, 1.442695
        %v1074 = vpow.pop %v1073
        %v1075 = vmul.f32 %v1055, 1.442695
        %v1076 = vpow.pop %v1075
        %v1077 = vmul.f32 %v1056, 1.442695
        %v1078 = vpow.pop %v1077
        %v1079 = vmul.f32 %v1057, 1.442695
        %v1080 = vpow.pop %v1079
        %v1081 = vmul.f32 %v1058, 1.442695
        %v1082 = vpow.pop %v1081
        %v1083 = vmul.f32 %v1059, 1.442695
        %v1084 = vpow.pop %v1083
        %v1085 = vmul.f32 %v1060, 1.442695
        %v1086 = vpow.pop %v1085
        %v1087 = vmul.f32 %v1061, 1.442695
        %v1088 = vpow.pop %v1087
        %v1089 = vmul.f32 %v1062, 1.442695
        %v1090 = vpow.pop %v1089
        %v1091 = vmul.f32 %v1063, 1.442695
        %v1092 = vpow.pop %v1091
        %v1093 = vmul.f32 %v1064, 1.442695
        %v1094 = vpow.pop %v1093
        %v1095 = vmul.f32 %v1065, 1.442695
        %v1096 = vpow.pop %v1095
        %v1097 = vmul.f32 %v1066, 1.442695
        %v1098 = vpow.pop %v1097
        %v1099 = vld [vmem:[#allocation3] sm:$0xff]
        %v1100 = vld [vmem:[#allocation3 + $0x8] sm:$0xff]
        %v1101 = vld [vmem:[#allocation3 + $0x10] sm:$0xff]
        %v1102 = vld [vmem:[#allocation3 + $0x18] sm:$0xff]
        %v1103 = vld [vmem:[#allocation3 + $0x20] sm:$0xff]
        %v1104 = vld [vmem:[#allocation3 + $0x28] sm:$0xff]
        %v1105 = vld [vmem:[#allocation3 + $0x30] sm:$0xff]
        %v1106 = vld [vmem:[#allocation3 + $0x38] sm:$0xff]
        %v1107 = vld [vmem:[#allocation3 + $0x40] sm:$0xff]
        %v1108 = vld [vmem:[#allocation3 + $0x48] sm:$0xff]
        %v1109 = vld [vmem:[#allocation3 + $0x50] sm:$0xff]
        %v1110 = vld [vmem:[#allocation3 + $0x58] sm:$0xff]
        %v1111 = vld [vmem:[#allocation3 + $0x60] sm:$0xff]
        %v1112 = vld [vmem:[#allocation3 + $0x68] sm:$0xff]
        %v1113 = vld [vmem:[#allocation3 + $0x70] sm:$0xff]
        %v1114 = vld [vmem:[#allocation3 + $0x78] sm:$0xff]
        %v1115 = vmul.f32 %v940, %v1099
        %v1116 = vmul.f32 %v942, %v1100
        %v1117 = vmul.f32 %v944, %v1101
        %v1118 = vmul.f32 %v946, %v1102
        %v1119 = vmul.f32 %v948, %v1103
        %v1120 = vmul.f32 %v950, %v1104
        %v1121 = vmul.f32 %v952, %v1105
        %v1122 = vmul.f32 %v954, %v1106
        %v1123 = vmul.f32 %v956, %v1107
        %v1124 = vmul.f32 %v958, %v1108
        %v1125 = vmul.f32 %v960, %v1109
        %v1126 = vmul.f32 %v962, %v1110
        %v1127 = vmul.f32 %v964, %v1111
        %v1128 = vmul.f32 %v966, %v1112
        %v1129 = vmul.f32 %v968, %v1113
        %v1130 = vmul.f32 %v970, %v1114
        %v1131 = vsel %vm858, %v1068, 0.0
        %1132 = vadd.xlane.f32.xlu0 %v1131
        %v1133 = vpop.xlane.xlu0 %1132
        %v1134 = vsel %vm858, %v1070, 0.0
        %1135 = vadd.xlane.f32.xlu0 %v1134
        %v1136 = vpop.xlane.xlu0 %1135
        %v1137 = vsel %vm858, %v1072, 0.0
        %1138 = vadd.xlane.f32.xlu0 %v1137
        %v1139 = vpop.xlane.xlu0 %1138
        %v1140 = vsel %vm858, %v1074, 0.0
        %1141 = vadd.xlane.f32.xlu0 %v1140
        %v1142 = vpop.xlane.xlu0 %1141
        %v1143 = vsel %vm858, %v1076, 0.0
        %1144 = vadd.xlane.f32.xlu0 %v1143
        %v1145 = vpop.xlane.xlu0 %1144
        %v1146 = vsel %vm858, %v1078, 0.0
        %1147 = vadd.xlane.f32.xlu0 %v1146
        %v1148 = vpop.xlane.xlu0 %1147
        %v1149 = vsel %vm858, %v1080, 0.0
        %1150 = vadd.xlane.f32.xlu0 %v1149
        %v1151 = vpop.xlane.xlu0 %1150
        %v1152 = vsel %vm858, %v1082, 0.0
        %1153 = vadd.xlane.f32.xlu0 %v1152
        %v1154 = vpop.xlane.xlu0 %1153
        %v1155 = vsel %vm858, %v1084, 0.0
        %1156 = vadd.xlane.f32.xlu0 %v1155
        %v1157 = vpop.xlane.xlu0 %1156
        %v1158 = vsel %vm858, %v1086, 0.0
        %1159 = vadd.xlane.f32.xlu0 %v1158
        %v1160 = vpop.xlane.xlu0 %1159
        %v1161 = vsel %vm858, %v1088, 0.0
        %1162 = vadd.xlane.f32.xlu0 %v1161
        %v1163 = vpop.xlane.xlu0 %1162
        %v1164 = vsel %vm858, %v1090, 0.0
        %1165 = vadd.xlane.f32.xlu0 %v1164
        %v1166 = vpop.xlane.xlu0 %1165
        %v1167 = vsel %vm858, %v1092, 0.0
        %1168 = vadd.xlane.f32.xlu0 %v1167
        %v1169 = vpop.xlane.xlu0 %1168
        %v1170 = vsel %vm858, %v1094, 0.0
        %1171 = vadd.xlane.f32.xlu0 %v1170
        %v1172 = vpop.xlane.xlu0 %1171
        %v1173 = vsel %vm858, %v1096, 0.0
        %1174 = vadd.xlane.f32.xlu0 %v1173
        %v1175 = vpop.xlane.xlu0 %1174
        %v1176 = vsel %vm858, %v1098, 0.0
        %1177 = vadd.xlane.f32.xlu0 %v1176
        %v1178 = vpop.xlane.xlu0 %1177
        %v1179 = vadd.f32 %v1115, %v1133
        %v1180 = vadd.f32 %v1116, %v1136
        %v1181 = vadd.f32 %v1117, %v1139
        %v1182 = vadd.f32 %v1118, %v1142
        %v1183 = vadd.f32 %v1119, %v1145
        %v1184 = vadd.f32 %v1120, %v1148
        %v1185 = vadd.f32 %v1121, %v1151
        %v1186 = vadd.f32 %v1122, %v1154
        %v1187 = vadd.f32 %v1123, %v1157
        %v1188 = vadd.f32 %v1124, %v1160
        %v1189 = vadd.f32 %v1125, %v1163
        %v1190 = vadd.f32 %v1126, %v1166
        %v1191 = vadd.f32 %v1127, %v1169
        %v1192 = vadd.f32 %v1128, %v1172
        %v1193 = vadd.f32 %v1129, %v1175
        %v1194 = vadd.f32 %v1130, %v1178
        %vm1195 = vcmask 7168
        %1196 = vst.msk [vmem:[#allocation3] sm:$0xff] %vm1195, %v1179
        %1197 = vst.msk [vmem:[#allocation3 + $0x8] sm:$0xff] %vm1195, %v1180
        %1198 = vst.msk [vmem:[#allocation3 + $0x10] sm:$0xff] %vm1195, %v1181
        %1199 = vst.msk [vmem:[#allocation3 + $0x18] sm:$0xff] %vm1195, %v1182
        %1200 = vst.msk [vmem:[#allocation3 + $0x20] sm:$0xff] %vm1195, %v1183
        %1201 = vst.msk [vmem:[#allocation3 + $0x28] sm:$0xff] %vm1195, %v1184
        %1202 = vst.msk [vmem:[#allocation3 + $0x30] sm:$0xff] %vm1195, %v1185
        %1203 = vst.msk [vmem:[#allocation3 + $0x38] sm:$0xff] %vm1195, %v1186
        %1204 = vst.msk [vmem:[#allocation3 + $0x40] sm:$0xff] %vm1195, %v1187
        %1205 = vst.msk [vmem:[#allocation3 + $0x48] sm:$0xff] %vm1195, %v1188
        %1206 = vst.msk [vmem:[#allocation3 + $0x50] sm:$0xff] %vm1195, %v1189
        %1207 = vst.msk [vmem:[#allocation3 + $0x58] sm:$0xff] %vm1195, %v1190
        %1208 = vst.msk [vmem:[#allocation3 + $0x60] sm:$0xff] %vm1195, %v1191
        %1209 = vst.msk [vmem:[#allocation3 + $0x68] sm:$0xff] %vm1195, %v1192
        %1210 = vst.msk [vmem:[#allocation3 + $0x70] sm:$0xff] %vm1195, %v1193
        %1211 = vst.msk [vmem:[#allocation3 + $0x78] sm:$0xff] %vm1195, %v1194
        %v1212 = vld [vmem:[#allocation4] sm:$0xff]
        %v1213 = vld [vmem:[#allocation4 + $0x8] sm:$0xff]
        %v1214 = vld [vmem:[#allocation4 + $0x10] sm:$0xff]
        %v1215 = vld [vmem:[#allocation4 + $0x18] sm:$0xff]
        %v1216 = vld [vmem:[#allocation4 + $0x20] sm:$0xff]
        %v1217 = vld [vmem:[#allocation4 + $0x28] sm:$0xff]
        %v1218 = vld [vmem:[#allocation4 + $0x30] sm:$0xff]
        %v1219 = vld [vmem:[#allocation4 + $0x38] sm:$0xff]
        %v1220 = vld [vmem:[#allocation4 + $0x40] sm:$0xff]
        %v1221 = vld [vmem:[#allocation4 + $0x48] sm:$0xff]
        %v1222 = vld [vmem:[#allocation4 + $0x50] sm:$0xff]
        %v1223 = vld [vmem:[#allocation4 + $0x58] sm:$0xff]
        %v1224 = vld [vmem:[#allocation4 + $0x60] sm:$0xff]
        %v1225 = vld [vmem:[#allocation4 + $0x68] sm:$0xff]
        %v1226 = vld [vmem:[#allocation4 + $0x70] sm:$0xff]
        %v1227 = vld [vmem:[#allocation4 + $0x78] sm:$0xff]
        %1229 = vset.pattern.permute.xlu0 0
        %1230 = vperm.xlu0 %1229, %v940
        %v1231 = vpop.permute.xlu0 %1230
        %1234 = vset.pattern.permute.xlu0 0
        %1235 = vperm.xlu0 %1234, %v942
        %v1236 = vpop.permute.xlu0 %1235
        %1239 = vset.pattern.permute.xlu0 0
        %1240 = vperm.xlu0 %1239, %v944
        %v1241 = vpop.permute.xlu0 %1240
        %1244 = vset.pattern.permute.xlu0 0
        %1245 = vperm.xlu0 %1244, %v946
        %v1246 = vpop.permute.xlu0 %1245
        %1249 = vset.pattern.permute.xlu0 0
        %1250 = vperm.xlu0 %1249, %v948
        %v1251 = vpop.permute.xlu0 %1250
        %1254 = vset.pattern.permute.xlu0 0
        %1255 = vperm.xlu0 %1254, %v950
        %v1256 = vpop.permute.xlu0 %1255
        %1259 = vset.pattern.permute.xlu0 0
        %1260 = vperm.xlu0 %1259, %v952
        %v1261 = vpop.permute.xlu0 %1260
        %1264 = vset.pattern.permute.xlu0 0
        %1265 = vperm.xlu0 %1264, %v954
        %v1266 = vpop.permute.xlu0 %1265
        %1269 = vset.pattern.permute.xlu0 0
        %1270 = vperm.xlu0 %1269, %v956
        %v1271 = vpop.permute.xlu0 %1270
        %1274 = vset.pattern.permute.xlu0 0
        %1275 = vperm.xlu0 %1274, %v958
        %v1276 = vpop.permute.xlu0 %1275
        %1279 = vset.pattern.permute.xlu0 0
        %1280 = vperm.xlu0 %1279, %v960
        %v1281 = vpop.permute.xlu0 %1280
        %1284 = vset.pattern.permute.xlu0 0
        %1285 = vperm.xlu0 %1284, %v962
        %v1286 = vpop.permute.xlu0 %1285
        %1289 = vset.pattern.permute.xlu0 0
        %1290 = vperm.xlu0 %1289, %v964
        %v1291 = vpop.permute.xlu0 %1290
        %1294 = vset.pattern.permute.xlu0 0
        %1295 = vperm.xlu0 %1294, %v966
        %v1296 = vpop.permute.xlu0 %1295
        %1299 = vset.pattern.permute.xlu0 0
        %1300 = vperm.xlu0 %1299, %v968
        %v1301 = vpop.permute.xlu0 %1300
        %1304 = vset.pattern.permute.xlu0 0
        %1305 = vperm.xlu0 %1304, %v970
        %v1306 = vpop.permute.xlu0 %1305
        %v1308 = vmul.f32 %v1231, %v1212
        %v1309 = vmul.f32 %v1236, %v1213
        %v1310 = vmul.f32 %v1241, %v1214
        %v1311 = vmul.f32 %v1246, %v1215
        %v1312 = vmul.f32 %v1251, %v1216
        %v1313 = vmul.f32 %v1256, %v1217
        %v1314 = vmul.f32 %v1261, %v1218
        %v1315 = vmul.f32 %v1266, %v1219
        %v1316 = vmul.f32 %v1271, %v1220
        %v1317 = vmul.f32 %v1276, %v1221
        %v1318 = vmul.f32 %v1281, %v1222
        %v1319 = vmul.f32 %v1286, %v1223
        %v1320 = vmul.f32 %v1291, %v1224
        %v1321 = vmul.f32 %v1296, %v1225
        %v1322 = vmul.f32 %v1301, %v1226
        %v1323 = vmul.f32 %v1306, %v1227
        %v1324 = vld [vmem:[%s266] sm:$0xff]
        %v1325 = vld [vmem:[%s266 + $0x8] sm:$0xff]
        %v1326 = vld [vmem:[%s266 + $0x10] sm:$0xff]
        %v1327 = vld [vmem:[%s266 + $0x18] sm:$0xff]
        %v1328 = vld [vmem:[%s266 + $0x20] sm:$0xff]
        %v1329 = vld [vmem:[%s266 + $0x28] sm:$0xff]
        %v1330 = vld [vmem:[%s266 + $0x30] sm:$0xff]
        %v1331 = vld [vmem:[%s266 + $0x38] sm:$0xff]
        %v1332 = vld [vmem:[%s266 + $0x40] sm:$0xff]
        %v1333 = vld [vmem:[%s266 + $0x48] sm:$0xff]
        %v1334 = vld [vmem:[%s266 + $0x50] sm:$0xff]
        %v1335 = vld [vmem:[%s266 + $0x58] sm:$0xff]
        %v1336 = vld [vmem:[%s266 + $0x60] sm:$0xff]
        %v1337 = vld [vmem:[%s266 + $0x68] sm:$0xff]
        %v1338 = vld [vmem:[%s266 + $0x70] sm:$0xff]
        %v1339 = vld [vmem:[%s266 + $0x78] sm:$0xff]
        %v1341 = vsel %vm858, %v1068, 0
        %v1344 = vsel %vm858, %v1070, 0
        %v1347 = vsel %vm858, %v1072, 0
        %v1350 = vsel %vm858, %v1074, 0
        %1352 = vmatprep.subr.mxu0 0.0
        %1353 = vmatpush1.msra.mxu0 0.0
        %1354 = vmatprep.subr.mxu0 0.0
        %1355 = vmatpush1.msra.mxu0 0.0
        %1356 = vmatprep.subr.mxu0 0.0
        %1357 = vmatpush1.msra.mxu0 0.0
        %1358 = vmatprep.subr.mxu0 0.0
        %1359 = vmatpush1.msra.mxu0 0.0
        %1360 = vmatprep.subr.mxu0 0.0
        %1361 = vmatpush1.msra.mxu0 0.0
        %1362 = vmatprep.subr.mxu0 0.0
        %1363 = vmatpush1.msra.mxu0 0.0
        %1364 = vmatprep.subr.mxu0 0.0
        %1365 = vmatpush1.msra.mxu0 0.0
        %1366 = vmatprep.subr.mxu0 0.0
        %1367 = vmatpush1.msra.mxu0 0.0
        %1368 = vmatprep.subr.mxu0 0.0
        %1369 = vmatpush1.msra.mxu0 0.0
        %1370 = vmatprep.subr.mxu0 0.0
        %1371 = vmatpush1.msra.mxu0 0.0
        %1372 = vmatprep.subr.mxu0 0.0
        %1373 = vmatpush1.msra.mxu0 0.0
        %1374 = vmatprep.subr.mxu0 0.0
        %1375 = vmatpush1.msra.mxu0 0.0
        %1376 = vmatprep.subr.mxu0 0.0
        %1377 = vmatpush1.msra.mxu0 %v1327
        %1378 = vmatprep.subr.mxu0 0.0
        %1379 = vmatpush1.msra.mxu0 %v1326
        %1380 = vmatprep.subr.mxu0 0.0
        %1381 = vmatpush1.msra.mxu0 %v1325
        %1382 = vmatprep.subr.mxu0 0.0
        %1383 = vmatpush1.msra.mxu0 %v1324
        %1384 = vmatprep.subr.mxu0 0.0
        %1385 = vmatpush2.msra.mxu0 0.0
        %1386 = vmatprep.subr.mxu0 0.0
        %1387 = vmatpush2.msra.mxu0 0.0
        %1388 = vmatprep.subr.mxu0 0.0
        %1389 = vmatpush2.msra.mxu0 0.0
        %1390 = vmatprep.subr.mxu0 0.0
        %1391 = vmatpush2.msra.mxu0 0.0
        %1392 = vmatprep.subr.mxu0 0.0
        %1393 = vmatpush2.msra.mxu0 0.0
        %1394 = vmatprep.subr.mxu0 0.0
        %1395 = vmatpush2.msra.mxu0 0.0
        %1396 = vmatprep.subr.mxu0 0.0
        %1397 = vmatpush2.msra.mxu0 0.0
        %1398 = vmatprep.subr.mxu0 0.0
        %1399 = vmatpush2.msra.mxu0 0.0
        %1400 = vmatprep.subr.mxu0 0.0
        %1401 = vmatpush2.msra.mxu0 0.0
        %1402 = vmatprep.subr.mxu0 0.0
        %1403 = vmatpush2.msra.mxu0 0.0
        %1404 = vmatprep.subr.mxu0 0.0
        %1405 = vmatpush2.msra.mxu0 0.0
        %1406 = vmatprep.subr.mxu0 0.0
        %1407 = vmatpush2.msra.mxu0 0.0
        %1408 = vmatprep.subr.mxu0 0.0
        %1409 = vmatpush2.msra.mxu0 0.0
        %1410 = vmatprep.subr.mxu0 0.0
        %1411 = vmatpush2.msra.mxu0 0.0
        %1412 = vmatprep.subr.mxu0 0.0
        %1413 = vmatpush2.msra.mxu0 0.0
        %1414 = vmatprep.subr.mxu0 0.0
        %1415 = vmatpush2.msra.mxu0 0.0
        %1416 = vmatprep.mubr.f32.mxu0 0.0
        %1417 = vmatmul.mubr.f32.gmra.mxu0 %v1341
        %v1418 = vpop.f32.mrf.mxu0
        %v1419 = vadd.f32 0.0, %v1418
        %v1420 = vpop.f32.mrf.mxu0
        %1421 = vmatprep.mubr.f32.mxu0 0.0
        %1422 = vmatmul.mubr.f32.gmra.mxu0 %v1344
        %v1423 = vpop.f32.mrf.mxu0
        %v1424 = vadd.f32 0.0, %v1423
        %v1425 = vpop.f32.mrf.mxu0
        %1426 = vmatprep.mubr.f32.mxu0 0.0
        %1427 = vmatmul.mubr.f32.gmra.mxu0 %v1347
        %v1428 = vpop.f32.mrf.mxu0
        %v1429 = vadd.f32 0.0, %v1428
        %v1430 = vpop.f32.mrf.mxu0
        %1431 = vmatprep.mubr.f32.mxu0 0.0
        %1432 = vmatmul.mubr.f32.gmra.mxu0 %v1350
        %v1433 = vpop.f32.mrf.mxu0
        %v1434 = vadd.f32 0.0, %v1433
        %v1435 = vpop.f32.mrf.mxu0
        %1436 = vdwg.mxu0
        %v1438 = vsel %vm858, %v1076, 0
        %v1441 = vsel %vm858, %v1078, 0
        %v1444 = vsel %vm858, %v1080, 0
        %v1447 = vsel %vm858, %v1082, 0
        %1449 = vmatprep.subr.mxu0 0.0
        %1450 = vmatpush1.msra.mxu0 0.0
        %1451 = vmatprep.subr.mxu0 0.0
        %1452 = vmatpush1.msra.mxu0 0.0
        %1453 = vmatprep.subr.mxu0 0.0
        %1454 = vmatpush1.msra.mxu0 0.0
        %1455 = vmatprep.subr.mxu0 0.0
        %1456 = vmatpush1.msra.mxu0 0.0
        %1457 = vmatprep.subr.mxu0 0.0
        %1458 = vmatpush1.msra.mxu0 0.0
        %1459 = vmatprep.subr.mxu0 0.0
        %1460 = vmatpush1.msra.mxu0 0.0
        %1461 = vmatprep.subr.mxu0 0.0
        %1462 = vmatpush1.msra.mxu0 0.0
        %1463 = vmatprep.subr.mxu0 0.0
        %1464 = vmatpush1.msra.mxu0 0.0
        %1465 = vmatprep.subr.mxu0 0.0
        %1466 = vmatpush1.msra.mxu0 0.0
        %1467 = vmatprep.subr.mxu0 0.0
        %1468 = vmatpush1.msra.mxu0 0.0
        %1469 = vmatprep.subr.mxu0 0.0
        %1470 = vmatpush1.msra.mxu0 0.0
        %1471 = vmatprep.subr.mxu0 0.0
        %1472 = vmatpush1.msra.mxu0 0.0
        %1473 = vmatprep.subr.mxu0 0.0
        %1474 = vmatpush1.msra.mxu0 %v1331
        %1475 = vmatprep.subr.mxu0 0.0
        %1476 = vmatpush1.msra.mxu0 %v1330
        %1477 = vmatprep.subr.mxu0 0.0
        %1478 = vmatpush1.msra.mxu0 %v1329
        %1479 = vmatprep.subr.mxu0 0.0
        %1480 = vmatpush1.msra.mxu0 %v1328
        %1481 = vmatprep.subr.mxu0 0.0
        %1482 = vmatpush2.msra.mxu0 0.0
        %1483 = vmatprep.subr.mxu0 0.0
        %1484 = vmatpush2.msra.mxu0 0.0
        %1485 = vmatprep.subr.mxu0 0.0
        %1486 = vmatpush2.msra.mxu0 0.0
        %1487 = vmatprep.subr.mxu0 0.0
        %1488 = vmatpush2.msra.mxu0 0.0
        %1489 = vmatprep.subr.mxu0 0.0
        %1490 = vmatpush2.msra.mxu0 0.0
        %1491 = vmatprep.subr.mxu0 0.0
        %1492 = vmatpush2.msra.mxu0 0.0
        %1493 = vmatprep.subr.mxu0 0.0
        %1494 = vmatpush2.msra.mxu0 0.0
        %1495 = vmatprep.subr.mxu0 0.0
        %1496 = vmatpush2.msra.mxu0 0.0
        %1497 = vmatprep.subr.mxu0 0.0
        %1498 = vmatpush2.msra.mxu0 0.0
        %1499 = vmatprep.subr.mxu0 0.0
        %1500 = vmatpush2.msra.mxu0 0.0
        %1501 = vmatprep.subr.mxu0 0.0
        %1502 = vmatpush2.msra.mxu0 0.0
        %1503 = vmatprep.subr.mxu0 0.0
        %1504 = vmatpush2.msra.mxu0 0.0
        %1505 = vmatprep.subr.mxu0 0.0
        %1506 = vmatpush2.msra.mxu0 0.0
        %1507 = vmatprep.subr.mxu0 0.0
        %1508 = vmatpush2.msra.mxu0 0.0
        %1509 = vmatprep.subr.mxu0 0.0
        %1510 = vmatpush2.msra.mxu0 0.0
        %1511 = vmatprep.subr.mxu0 0.0
        %1512 = vmatpush2.msra.mxu0 0.0
        %1513 = vmatprep.mubr.f32.mxu0 0.0
        %1514 = vmatmul.mubr.f32.gmra.mxu0 %v1438
        %v1515 = vpop.f32.mrf.mxu0
        %v1516 = vadd.f32 0.0, %v1515
        %v1517 = vpop.f32.mrf.mxu0
        %1518 = vmatprep.mubr.f32.mxu0 0.0
        %1519 = vmatmul.mubr.f32.gmra.mxu0 %v1441
        %v1520 = vpop.f32.mrf.mxu0
        %v1521 = vadd.f32 0.0, %v1520
        %v1522 = vpop.f32.mrf.mxu0
        %1523 = vmatprep.mubr.f32.mxu0 0.0
        %1524 = vmatmul.mubr.f32.gmra.mxu0 %v1444
        %v1525 = vpop.f32.mrf.mxu0
        %v1526 = vadd.f32 0.0, %v1525
        %v1527 = vpop.f32.mrf.mxu0
        %1528 = vmatprep.mubr.f32.mxu0 0.0
        %1529 = vmatmul.mubr.f32.gmra.mxu0 %v1447
        %v1530 = vpop.f32.mrf.mxu0
        %v1531 = vadd.f32 0.0, %v1530
        %v1532 = vpop.f32.mrf.mxu0
        %1533 = vdwg.mxu0
        %v1535 = vsel %vm858, %v1084, 0
        %v1538 = vsel %vm858, %v1086, 0
        %v1541 = vsel %vm858, %v1088, 0
        %v1544 = vsel %vm858, %v1090, 0
        %1546 = vmatprep.subr.mxu0 0.0
        %1547 = vmatpush1.msra.mxu0 0.0
        %1548 = vmatprep.subr.mxu0 0.0
        %1549 = vmatpush1.msra.mxu0 0.0
        %1550 = vmatprep.subr.mxu0 0.0
        %1551 = vmatpush1.msra.mxu0 0.0
        %1552 = vmatprep.subr.mxu0 0.0
        %1553 = vmatpush1.msra.mxu0 0.0
        %1554 = vmatprep.subr.mxu0 0.0
        %1555 = vmatpush1.msra.mxu0 0.0
        %1556 = vmatprep.subr.mxu0 0.0
        %1557 = vmatpush1.msra.mxu0 0.0
        %1558 = vmatprep.subr.mxu0 0.0
        %1559 = vmatpush1.msra.mxu0 0.0
        %1560 = vmatprep.subr.mxu0 0.0
        %1561 = vmatpush1.msra.mxu0 0.0
        %1562 = vmatprep.subr.mxu0 0.0
        %1563 = vmatpush1.msra.mxu0 0.0
        %1564 = vmatprep.subr.mxu0 0.0
        %1565 = vmatpush1.msra.mxu0 0.0
        %1566 = vmatprep.subr.mxu0 0.0
        %1567 = vmatpush1.msra.mxu0 0.0
        %1568 = vmatprep.subr.mxu0 0.0
        %1569 = vmatpush1.msra.mxu0 0.0
        %1570 = vmatprep.subr.mxu0 0.0
        %1571 = vmatpush1.msra.mxu0 %v1335
        %1572 = vmatprep.subr.mxu0 0.0
        %1573 = vmatpush1.msra.mxu0 %v1334
        %1574 = vmatprep.subr.mxu0 0.0
        %1575 = vmatpush1.msra.mxu0 %v1333
        %1576 = vmatprep.subr.mxu0 0.0
        %1577 = vmatpush1.msra.mxu0 %v1332
        %1578 = vmatprep.subr.mxu0 0.0
        %1579 = vmatpush2.msra.mxu0 0.0
        %1580 = vmatprep.subr.mxu0 0.0
        %1581 = vmatpush2.msra.mxu0 0.0
        %1582 = vmatprep.subr.mxu0 0.0
        %1583 = vmatpush2.msra.mxu0 0.0
        %1584 = vmatprep.subr.mxu0 0.0
        %1585 = vmatpush2.msra.mxu0 0.0
        %1586 = vmatprep.subr.mxu0 0.0
        %1587 = vmatpush2.msra.mxu0 0.0
        %1588 = vmatprep.subr.mxu0 0.0
        %1589 = vmatpush2.msra.mxu0 0.0
        %1590 = vmatprep.subr.mxu0 0.0
        %1591 = vmatpush2.msra.mxu0 0.0
        %1592 = vmatprep.subr.mxu0 0.0
        %1593 = vmatpush2.msra.mxu0 0.0
        %1594 = vmatprep.subr.mxu0 0.0
        %1595 = vmatpush2.msra.mxu0 0.0
        %1596 = vmatprep.subr.mxu0 0.0
        %1597 = vmatpush2.msra.mxu0 0.0
        %1598 = vmatprep.subr.mxu0 0.0
        %1599 = vmatpush2.msra.mxu0 0.0
        %1600 = vmatprep.subr.mxu0 0.0
        %1601 = vmatpush2.msra.mxu0 0.0
        %1602 = vmatprep.subr.mxu0 0.0
        %1603 = vmatpush2.msra.mxu0 0.0
        %1604 = vmatprep.subr.mxu0 0.0
        %1605 = vmatpush2.msra.mxu0 0.0
        %1606 = vmatprep.subr.mxu0 0.0
        %1607 = vmatpush2.msra.mxu0 0.0
        %1608 = vmatprep.subr.mxu0 0.0
        %1609 = vmatpush2.msra.mxu0 0.0
        %1610 = vmatprep.mubr.f32.mxu0 0.0
        %1611 = vmatmul.mubr.f32.gmra.mxu0 %v1535
        %v1612 = vpop.f32.mrf.mxu0
        %v1613 = vadd.f32 0.0, %v1612
        %v1614 = vpop.f32.mrf.mxu0
        %1615 = vmatprep.mubr.f32.mxu0 0.0
        %1616 = vmatmul.mubr.f32.gmra.mxu0 %v1538
        %v1617 = vpop.f32.mrf.mxu0
        %v1618 = vadd.f32 0.0, %v1617
        %v1619 = vpop.f32.mrf.mxu0
        %1620 = vmatprep.mubr.f32.mxu0 0.0
        %1621 = vmatmul.mubr.f32.gmra.mxu0 %v1541
        %v1622 = vpop.f32.mrf.mxu0
        %v1623 = vadd.f32 0.0, %v1622
        %v1624 = vpop.f32.mrf.mxu0
        %1625 = vmatprep.mubr.f32.mxu0 0.0
        %1626 = vmatmul.mubr.f32.gmra.mxu0 %v1544
        %v1627 = vpop.f32.mrf.mxu0
        %v1628 = vadd.f32 0.0, %v1627
        %v1629 = vpop.f32.mrf.mxu0
        %1630 = vdwg.mxu0
        %v1632 = vsel %vm858, %v1092, 0
        %v1635 = vsel %vm858, %v1094, 0
        %v1638 = vsel %vm858, %v1096, 0
        %v1641 = vsel %vm858, %v1098, 0
        %1643 = vmatprep.subr.mxu0 0.0
        %1644 = vmatpush1.msra.mxu0 0.0
        %1645 = vmatprep.subr.mxu0 0.0
        %1646 = vmatpush1.msra.mxu0 0.0
        %1647 = vmatprep.subr.mxu0 0.0
        %1648 = vmatpush1.msra.mxu0 0.0
        %1649 = vmatprep.subr.mxu0 0.0
        %1650 = vmatpush1.msra.mxu0 0.0
        %1651 = vmatprep.subr.mxu0 0.0
        %1652 = vmatpush1.msra.mxu0 0.0
        %1653 = vmatprep.subr.mxu0 0.0
        %1654 = vmatpush1.msra.mxu0 0.0
        %1655 = vmatprep.subr.mxu0 0.0
        %1656 = vmatpush1.msra.mxu0 0.0
        %1657 = vmatprep.subr.mxu0 0.0
        %1658 = vmatpush1.msra.mxu0 0.0
        %1659 = vmatprep.subr.mxu0 0.0
        %1660 = vmatpush1.msra.mxu0 0.0
        %1661 = vmatprep.subr.mxu0 0.0
        %1662 = vmatpush1.msra.mxu0 0.0
        %1663 = vmatprep.subr.mxu0 0.0
        %1664 = vmatpush1.msra.mxu0 0.0
        %1665 = vmatprep.subr.mxu0 0.0
        %1666 = vmatpush1.msra.mxu0 0.0
        %1667 = vmatprep.subr.mxu0 0.0
        %1668 = vmatpush1.msra.mxu0 %v1339
        %1669 = vmatprep.subr.mxu0 0.0
        %1670 = vmatpush1.msra.mxu0 %v1338
        %1671 = vmatprep.subr.mxu0 0.0
        %1672 = vmatpush1.msra.mxu0 %v1337
        %1673 = vmatprep.subr.mxu0 0.0
        %1674 = vmatpush1.msra.mxu0 %v1336
        %1675 = vmatprep.subr.mxu0 0.0
        %1676 = vmatpush2.msra.mxu0 0.0
        %1677 = vmatprep.subr.mxu0 0.0
        %1678 = vmatpush2.msra.mxu0 0.0
        %1679 = vmatprep.subr.mxu0 0.0
        %1680 = vmatpush2.msra.mxu0 0.0
        %1681 = vmatprep.subr.mxu0 0.0
        %1682 = vmatpush2.msra.mxu0 0.0
        %1683 = vmatprep.subr.mxu0 0.0
        %1684 = vmatpush2.msra.mxu0 0.0
        %1685 = vmatprep.subr.mxu0 0.0
        %1686 = vmatpush2.msra.mxu0 0.0
        %1687 = vmatprep.subr.mxu0 0.0
        %1688 = vmatpush2.msra.mxu0 0.0
        %1689 = vmatprep.subr.mxu0 0.0
        %1690 = vmatpush2.msra.mxu0 0.0
        %1691 = vmatprep.subr.mxu0 0.0
        %1692 = vmatpush2.msra.mxu0 0.0
        %1693 = vmatprep.subr.mxu0 0.0
        %1694 = vmatpush2.msra.mxu0 0.0
        %1695 = vmatprep.subr.mxu0 0.0
        %1696 = vmatpush2.msra.mxu0 0.0
        %1697 = vmatprep.subr.mxu0 0.0
        %1698 = vmatpush2.msra.mxu0 0.0
        %1699 = vmatprep.subr.mxu0 0.0
        %1700 = vmatpush2.msra.mxu0 0.0
        %1701 = vmatprep.subr.mxu0 0.0
        %1702 = vmatpush2.msra.mxu0 0.0
        %1703 = vmatprep.subr.mxu0 0.0
        %1704 = vmatpush2.msra.mxu0 0.0
        %1705 = vmatprep.subr.mxu0 0.0
        %1706 = vmatpush2.msra.mxu0 0.0
        %1707 = vmatprep.mubr.f32.mxu0 0.0
        %1708 = vmatmul.mubr.f32.gmra.mxu0 %v1632
        %v1709 = vpop.f32.mrf.mxu0
        %v1710 = vadd.f32 0.0, %v1709
        %v1711 = vpop.f32.mrf.mxu0
        %1712 = vmatprep.mubr.f32.mxu0 0.0
        %1713 = vmatmul.mubr.f32.gmra.mxu0 %v1635
        %v1714 = vpop.f32.mrf.mxu0
        %v1715 = vadd.f32 0.0, %v1714
        %v1716 = vpop.f32.mrf.mxu0
        %1717 = vmatprep.mubr.f32.mxu0 0.0
        %1718 = vmatmul.mubr.f32.gmra.mxu0 %v1638
        %v1719 = vpop.f32.mrf.mxu0
        %v1720 = vadd.f32 0.0, %v1719
        %v1721 = vpop.f32.mrf.mxu0
        %1722 = vmatprep.mubr.f32.mxu0 0.0
        %1723 = vmatmul.mubr.f32.gmra.mxu0 %v1641
        %v1724 = vpop.f32.mrf.mxu0
        %v1725 = vadd.f32 0.0, %v1724
        %v1726 = vpop.f32.mrf.mxu0
        %1727 = vdwg.mxu0
        %v1728 = vadd.f32 %v1308, %v1419
        %v1729 = vadd.f32 %v1309, %v1424
        %v1730 = vadd.f32 %v1310, %v1429
        %v1731 = vadd.f32 %v1311, %v1434
        %v1732 = vadd.f32 %v1312, %v1516
        %v1733 = vadd.f32 %v1313, %v1521
        %v1734 = vadd.f32 %v1314, %v1526
        %v1735 = vadd.f32 %v1315, %v1531
        %v1736 = vadd.f32 %v1316, %v1613
        %v1737 = vadd.f32 %v1317, %v1618
        %v1738 = vadd.f32 %v1318, %v1623
        %v1739 = vadd.f32 %v1319, %v1628
        %v1740 = vadd.f32 %v1320, %v1710
        %v1741 = vadd.f32 %v1321, %v1715
        %v1742 = vadd.f32 %v1322, %v1720
        %v1743 = vadd.f32 %v1323, %v1725
        %1744 = vst.msk [vmem:[#allocation4] sm:$0xff] %vm405, %v1728
        %1745 = vst.msk [vmem:[#allocation4 + $0x8] sm:$0xff] %vm405, %v1729
        %1746 = vst.msk [vmem:[#allocation4 + $0x10] sm:$0xff] %vm405, %v1730
        %1747 = vst.msk [vmem:[#allocation4 + $0x18] sm:$0xff] %vm405, %v1731
        %1748 = vst.msk [vmem:[#allocation4 + $0x20] sm:$0xff] %vm405, %v1732
        %1749 = vst.msk [vmem:[#allocation4 + $0x28] sm:$0xff] %vm405, %v1733
        %1750 = vst.msk [vmem:[#allocation4 + $0x30] sm:$0xff] %vm405, %v1734
        %1751 = vst.msk [vmem:[#allocation4 + $0x38] sm:$0xff] %vm405, %v1735
        %1752 = vst.msk [vmem:[#allocation4 + $0x40] sm:$0xff] %vm405, %v1736
        %1753 = vst.msk [vmem:[#allocation4 + $0x48] sm:$0xff] %vm405, %v1737
        %1754 = vst.msk [vmem:[#allocation4 + $0x50] sm:$0xff] %vm405, %v1738
        %1755 = vst.msk [vmem:[#allocation4 + $0x58] sm:$0xff] %vm405, %v1739
        %1756 = vst.msk [vmem:[#allocation4 + $0x60] sm:$0xff] %vm405, %v1740
        %1757 = vst.msk [vmem:[#allocation4 + $0x68] sm:$0xff] %vm405, %v1741
        %1758 = vst.msk [vmem:[#allocation4 + $0x70] sm:$0xff] %vm405, %v1742
        %1759 = vst.msk [vmem:[#allocation4 + $0x78] sm:$0xff] %vm405, %v1743
        %1760 = vst.msk [vmem:[#allocation2] sm:$0xff] %vm1195, %v907
        %1761 = vst.msk [vmem:[#allocation2 + $0x8] sm:$0xff] %vm1195, %v908
        %1762 = vst.msk [vmem:[#allocation2 + $0x10] sm:$0xff] %vm1195, %v909
        %1763 = vst.msk [vmem:[#allocation2 + $0x18] sm:$0xff] %vm1195, %v910
        %1764 = vst.msk [vmem:[#allocation2 + $0x20] sm:$0xff] %vm1195, %v911
        %1765 = vst.msk [vmem:[#allocation2 + $0x28] sm:$0xff] %vm1195, %v912
        %1766 = vst.msk [vmem:[#allocation2 + $0x30] sm:$0xff] %vm1195, %v913
        %1767 = vst.msk [vmem:[#allocation2 + $0x38] sm:$0xff] %vm1195, %v914
        %1768 = vst.msk [vmem:[#allocation2 + $0x40] sm:$0xff] %vm1195, %v915
        %1769 = vst.msk [vmem:[#allocation2 + $0x48] sm:$0xff] %vm1195, %v916
        %1770 = vst.msk [vmem:[#allocation2 + $0x50] sm:$0xff] %vm1195, %v917
        %1771 = vst.msk [vmem:[#allocation2 + $0x58] sm:$0xff] %vm1195, %v918
        %1772 = vst.msk [vmem:[#allocation2 + $0x60] sm:$0xff] %vm1195, %v919
        %1773 = vst.msk [vmem:[#allocation2 + $0x68] sm:$0xff] %vm1195, %v920
        %1774 = vst.msk [vmem:[#allocation2 + $0x70] sm:$0xff] %vm1195, %v921
        %1775 = vst.msk [vmem:[#allocation2 + $0x78] sm:$0xff] %vm1195, %v922
        // Predicated region
        $region49: #{tpu_custom_call.1} parent=31 // pred_check
          %p1776 = pneg %p303
        $region50: #{tpu_custom_call.1} parent=31 // pred_check_branch
          %1778 = sbr.rel (%p1776) target = $region52
        $region51: #{tpu_custom_call.1} parent=31 // pred_region
          %v1779 = vld [vmem:[#allocation3] sm:$0xff]
          %v1780 = vld [vmem:[#allocation3 + $0x8] sm:$0xff]
          %v1781 = vld [vmem:[#allocation3 + $0x10] sm:$0xff]
          %v1782 = vld [vmem:[#allocation3 + $0x18] sm:$0xff]
          %v1783 = vld [vmem:[#allocation3 + $0x20] sm:$0xff]
          %v1784 = vld [vmem:[#allocation3 + $0x28] sm:$0xff]
          %v1785 = vld [vmem:[#allocation3 + $0x30] sm:$0xff]
          %v1786 = vld [vmem:[#allocation3 + $0x38] sm:$0xff]
          %v1787 = vld [vmem:[#allocation3 + $0x40] sm:$0xff]
          %v1788 = vld [vmem:[#allocation3 + $0x48] sm:$0xff]
          %v1789 = vld [vmem:[#allocation3 + $0x50] sm:$0xff]
          %v1790 = vld [vmem:[#allocation3 + $0x58] sm:$0xff]
          %v1791 = vld [vmem:[#allocation3 + $0x60] sm:$0xff]
          %v1792 = vld [vmem:[#allocation3 + $0x68] sm:$0xff]
          %v1793 = vld [vmem:[#allocation3 + $0x70] sm:$0xff]
          %v1794 = vld [vmem:[#allocation3 + $0x78] sm:$0xff]
          %v1795 = vrcp.pop %v1779
          %v1796 = vrcp.pop %v1780
          %v1797 = vrcp.pop %v1781
          %v1798 = vrcp.pop %v1782
          %v1799 = vrcp.pop %v1783
          %v1800 = vrcp.pop %v1784
          %v1801 = vrcp.pop %v1785
          %v1802 = vrcp.pop %v1786
          %v1803 = vrcp.pop %v1787
          %v1804 = vrcp.pop %v1788
          %v1805 = vrcp.pop %v1789
          %v1806 = vrcp.pop %v1790
          %v1807 = vrcp.pop %v1791
          %v1808 = vrcp.pop %v1792
          %v1809 = vrcp.pop %v1793
          %v1810 = vrcp.pop %v1794
          %v1811 = vld [vmem:[#allocation4] sm:$0xff]
          %v1812 = vld [vmem:[#allocation4 + $0x8] sm:$0xff]
          %v1813 = vld [vmem:[#allocation4 + $0x10] sm:$0xff]
          %v1814 = vld [vmem:[#allocation4 + $0x18] sm:$0xff]
          %v1815 = vld [vmem:[#allocation4 + $0x20] sm:$0xff]
          %v1816 = vld [vmem:[#allocation4 + $0x28] sm:$0xff]
          %v1817 = vld [vmem:[#allocation4 + $0x30] sm:$0xff]
          %v1818 = vld [vmem:[#allocation4 + $0x38] sm:$0xff]
          %v1819 = vld [vmem:[#allocation4 + $0x40] sm:$0xff]
          %v1820 = vld [vmem:[#allocation4 + $0x48] sm:$0xff]
          %v1821 = vld [vmem:[#allocation4 + $0x50] sm:$0xff]
          %v1822 = vld [vmem:[#allocation4 + $0x58] sm:$0xff]
          %v1823 = vld [vmem:[#allocation4 + $0x60] sm:$0xff]
          %v1824 = vld [vmem:[#allocation4 + $0x68] sm:$0xff]
          %v1825 = vld [vmem:[#allocation4 + $0x70] sm:$0xff]
          %v1826 = vld [vmem:[#allocation4 + $0x78] sm:$0xff]
          %1828 = vset.pattern.permute.xlu0 0
          %1829 = vperm.xlu0 %1828, %v1795
          %v1830 = vpop.permute.xlu0 %1829
          %1833 = vset.pattern.permute.xlu0 0
          %1834 = vperm.xlu0 %1833, %v1796
          %v1835 = vpop.permute.xlu0 %1834
          %1838 = vset.pattern.permute.xlu0 0
          %1839 = vperm.xlu0 %1838, %v1797
          %v1840 = vpop.permute.xlu0 %1839
          %1843 = vset.pattern.permute.xlu0 0
          %1844 = vperm.xlu0 %1843, %v1798
          %v1845 = vpop.permute.xlu0 %1844
          %1848 = vset.pattern.permute.xlu0 0
          %1849 = vperm.xlu0 %1848, %v1799
          %v1850 = vpop.permute.xlu0 %1849
          %1853 = vset.pattern.permute.xlu0 0
          %1854 = vperm.xlu0 %1853, %v1800
          %v1855 = vpop.permute.xlu0 %1854
          %1858 = vset.pattern.permute.xlu0 0
          %1859 = vperm.xlu0 %1858, %v1801
          %v1860 = vpop.permute.xlu0 %1859
          %1863 = vset.pattern.permute.xlu0 0
          %1864 = vperm.xlu0 %1863, %v1802
          %v1865 = vpop.permute.xlu0 %1864
          %1868 = vset.pattern.permute.xlu0 0
          %1869 = vperm.xlu0 %1868, %v1803
          %v1870 = vpop.permute.xlu0 %1869
          %1873 = vset.pattern.permute.xlu0 0
          %1874 = vperm.xlu0 %1873, %v1804
          %v1875 = vpop.permute.xlu0 %1874
          %1878 = vset.pattern.permute.xlu0 0
          %1879 = vperm.xlu0 %1878, %v1805
          %v1880 = vpop.permute.xlu0 %1879
          %1883 = vset.pattern.permute.xlu0 0
          %1884 = vperm.xlu0 %1883, %v1806
          %v1885 = vpop.permute.xlu0 %1884
          %1888 = vset.pattern.permute.xlu0 0
          %1889 = vperm.xlu0 %1888, %v1807
          %v1890 = vpop.permute.xlu0 %1889
          %1893 = vset.pattern.permute.xlu0 0
          %1894 = vperm.xlu0 %1893, %v1808
          %v1895 = vpop.permute.xlu0 %1894
          %1898 = vset.pattern.permute.xlu0 0
          %1899 = vperm.xlu0 %1898, %v1809
          %v1900 = vpop.permute.xlu0 %1899
          %1903 = vset.pattern.permute.xlu0 0
          %1904 = vperm.xlu0 %1903, %v1810
          %v1905 = vpop.permute.xlu0 %1904
          %v1907 = vmul.f32 %v1811, %v1830
          %v1908 = vmul.f32 %v1812, %v1835
          %v1909 = vmul.f32 %v1813, %v1840
          %v1910 = vmul.f32 %v1814, %v1845
          %v1911 = vmul.f32 %v1815, %v1850
          %v1912 = vmul.f32 %v1816, %v1855
          %v1913 = vmul.f32 %v1817, %v1860
          %v1914 = vmul.f32 %v1818, %v1865
          %v1915 = vmul.f32 %v1819, %v1870
          %v1916 = vmul.f32 %v1820, %v1875
          %v1917 = vmul.f32 %v1821, %v1880
          %v1918 = vmul.f32 %v1822, %v1885
          %v1919 = vmul.f32 %v1823, %v1890
          %v1920 = vmul.f32 %v1824, %v1895
          %v1921 = vmul.f32 %v1825, %v1900
          %v1922 = vmul.f32 %v1826, %v1905
          %1927 = vrot.lane.b32.xlu0 %v1911, 64
          %v1928 = vpop.permute.xlu0 %1927
          %1929 = vrot.lane.b32.xlu0 %v1912, 64
          %v1930 = vpop.permute.xlu0 %1929
          %1931 = vrot.lane.b32.xlu0 %v1913, 64
          %v1932 = vpop.permute.xlu0 %1931
          %1933 = vrot.lane.b32.xlu0 %v1914, 64
          %v1934 = vpop.permute.xlu0 %1933
          %1943 = vrot.lane.b32.xlu0 %v1919, 64
          %v1944 = vpop.permute.xlu0 %1943
          %1945 = vrot.lane.b32.xlu0 %v1920, 64
          %v1946 = vpop.permute.xlu0 %1945
          %1947 = vrot.lane.b32.xlu0 %v1921, 64
          %v1948 = vpop.permute.xlu0 %1947
          %1949 = vrot.lane.b32.xlu0 %v1922, 64
          %v1950 = vpop.permute.xlu0 %1949
          %v1955 = vsel %vm405, %v1907, %v1928
          %v1956 = vsel %vm405, %v1908, %v1930
          %v1957 = vsel %vm405, %v1909, %v1932
          %v1958 = vsel %vm405, %v1910, %v1934
          %v1959 = vsel %vm405, %v1915, %v1944
          %v1960 = vsel %vm405, %v1916, %v1946
          %v1961 = vsel %vm405, %v1917, %v1948
          %v1962 = vsel %vm405, %v1918, %v1950
          %1963 = vst [vmem:[%s298] sm:$0xff] %v1955
          %1964 = vst [vmem:[%s298 + $0x8] sm:$0xff] %v1959
          %1965 = vst [vmem:[%s298 + $0x10] sm:$0xff] %v1956
          %1966 = vst [vmem:[%s298 + $0x18] sm:$0xff] %v1960
          %1967 = vst [vmem:[%s298 + $0x20] sm:$0xff] %v1957
          %1968 = vst [vmem:[%s298 + $0x28] sm:$0xff] %v1961
          %1969 = vst [vmem:[%s298 + $0x30] sm:$0xff] %v1958
          %1970 = vst [vmem:[%s298 + $0x38] sm:$0xff] %v1962
        $region52: #{tpu_custom_call.1} parent=31 // pred_fallthru
          _
        %s1971 = sand.u32 %s136, 1
        %s1972 = scalar_lea.sflag [#allocation7], %s1971
        %s1973 = sand.u32 %s136, 1
        %s1974 = smul.addr %s1973, 64
        %s1975 = scalar_lea.vmem [#allocation11], %s1974
        // Predicated region
        $region53: #{tpu_custom_call.1} parent=31 // pred_check
          %p1976 = pneg %p146
        $region54: #{tpu_custom_call.1} parent=31 // pred_check_branch
          %1978 = sbr.rel (%p1976) target = $region56
        $region55: #{tpu_custom_call.1} parent=31 // pred_region
          %s1979 = smul.u32 4, %s29
          %s1981 = ssub.s32 1024, 1024
          %1982 = vsyncadd %s1972, %s1981
          %s1983 = smul.addr %s1979, 2
          %s1984 = smul.addr %s28, 8
          %s1985 = sadd.s32 %s1983, %s1984
          %s1986 = smul.addr %s1985, 128
          %s1987 = scalar_lea.hbm %s3, %s1986
          %s1988 = sshll.u32 %s1975, 4
          %s1989 = int_to_ptr.vmem [resolvable:$true] %s1988
          %1994 = dma.vmem_to_hbm [thread:$0]  %s1989, 1024, %s1987, %s1972, 256, 256, 16
        $region56: #{tpu_custom_call.1} parent=31 // pred_fallthru
          _
      $region32: #{tpu_custom_call.1} parent=5 // pred_fallthru
        _
      %p1995 = scmp.le.s32.totalorder 2, %s18
      // Predicated region
      $region57: #{tpu_custom_call.1} parent=5 // pred_check
        %p1996 = pneg %p1995
      $region58: #{tpu_custom_call.1} parent=5 // pred_check_branch
        %1998 = sbr.rel (%p1996) target = $region60
      $region59: #{tpu_custom_call.1} parent=5 // pred_region
        %s1999 = ssub.s32 %s18, 2
        // Predicated region
        $region61: #{tpu_custom_call.1} parent=59 // pred_check
          %p2000 = pneg %p152
        $region62: #{tpu_custom_call.1} parent=59 // pred_check_branch
          %2002 = sbr.rel (%p2000) target = $region64
        $region63: #{tpu_custom_call.1} parent=59 // pred_region
          %s2003 = sand.u32 %s137, 1
          %s2004 = scalar_lea.sflag [#allocation7], %s2003
          %s2005 = sand.u32 %s137, 1
          %s2006 = smul.addr %s2005, 64
          %s2007 = scalar_lea.vmem [#allocation11], %s2006
          %2008 = dma.done %s2004, 1024
        $region64: #{tpu_custom_call.1} parent=59 // pred_fallthru
          _
      $region60: #{tpu_custom_call.1} parent=5 // pred_fallthru
        _
    $region6: #{tpu_custom_call.1} parent=1 // loop_footer
      %s22 = sadd.s32 1, %s18
    $region7: #{tpu_custom_call.1} parent=1 // loop_footer_branch
      %17 = sbr.rel target = $region3
    $region8: #{tpu_custom_call.1} parent=1 // loop_exit
      _
    %2009 = vsyncpa [#allocation6], 1
    %s2010 = scalar_lea.sflag [#allocation6], 1
    %2011 = vsyncpa %s2010, 1
    %2012 = vsyncpa [#allocation9], 1
    %s2013 = scalar_lea.sflag [#allocation9], 1
    %2014 = vsyncpa %s2013, 1
    %2015 = vsyncpa [#allocation7], 1
    %s2016 = scalar_lea.sflag [#allocation7], 1
    %2017 = vsyncpa %s2016, 1

</llo_original>
